<compile_context>
chip_gen: v7x
topology: tpu7x:2x2x1
jax: 0.10.0
libtpu: 0.0.40
codegen_flags: <defaults>
</compile_context>

<pallas_src>
import functools

import jax
import jax.numpy as jnp
import numpy as np
from jax.experimental import pallas as pl
from jax.experimental.pallas import tpu as pltpu

LRELU_SLOPE = 0.2
BN_EPS = 1e-5
LANE = 128
TM_MAX = 512


def _round_up(x, m):
    return ((x + m - 1) // m) * m


def _choose_tm(m):
    # Largest row tile <= TM_MAX; M is padded up to a multiple of it.
    return min(TM_MAX, _round_up(m, 8))


@functools.lru_cache(maxsize=None)
def _vmem_limit_bytes():
    # ~half of physical VMEM, clamped to [32 MiB, 96 MiB]:
    # 64 MiB on 128 MiB parts (v5e/v6e), 32 MiB on 64 MiB v7x.
    default = 32 * 1024 * 1024
    try:
        cap = getattr(pltpu.get_tpu_info(), "vmem_capacity_bytes", None)
        if not cap:
            return default
        return int(min(96 * 1024 * 1024, max(default, cap // 2)))
    except Exception:
        return default


def _compiler_params():
    return pltpu.CompilerParams(
        dimension_semantics=("parallel",),
        vmem_limit_bytes=_vmem_limit_bytes(),
    )


# ---------------------------------------------------------------------------
# Kernels
# ---------------------------------------------------------------------------
def _mm_lrelu_kernel(x_ref, w_ref, o_ref):
    y = jnp.dot(x_ref[...], w_ref[...], preferred_element_type=jnp.float32)
    o_ref[...] = jnp.where(y > 0, y, LRELU_SLOPE * y).astype(o_ref.dtype)


def _mm_stats_kernel(x_ref, w_ref, y_ref, stats_ref):
    # Conv-as-matmul; stage raw f32 result, emit per-tile partial statistics
    # (row 0 = sum, row 1 = sum of squares). Zero-padded rows contribute 0.
    y = jnp.dot(x_ref[...], w_ref[...], preferred_element_type=jnp.float32)
    y_ref[...] = y
    s = jnp.sum(y, axis=0, keepdims=True)
    ss = jnp.sum(y * y, axis=0, keepdims=True)
    pad = jnp.zeros((6, y.shape[1]), jnp.float32)
    stats_ref[...] = jnp.concatenate([s, ss, pad], axis=0)[None]


def _bn_lrelu_kernel(y_ref, scale_ref, shift_ref, o_ref):
    z = y_ref[...] * scale_ref[...] + shift_ref[...]
    o_ref[...] = jnp.where(z > 0, z, LRELU_SLOPE * z).astype(o_ref.dtype)


def _dot1_sigmoid_kernel(x_ref, w_ref, o_ref):
    # Final layer has Cout == 1: lane-reduce instead of a 1-wide MXU matmul.
    y = jnp.sum(x_ref[...].astype(jnp.float32) * w_ref[...], axis=1, keepdims=True)
    o_ref[...] = jax.nn.sigmoid(y)


# ---------------------------------------------------------------------------
# pallas_call wrappers (row-tiled, M padded to a tile multiple).
# ---------------------------------------------------------------------------
def _pad_rows(x2d, m_pad):
    m = x2d.shape[0]
    if m_pad == m:
        return x2d
    return jnp.pad(x2d, ((0, m_pad - m), (0, 0)))


def _call_mm_lrelu(x2d, w2d):
    m, k = x2d.shape
    cp = w2d.shape[1]
    tm = _choose_tm(m)
    m_pad = _round_up(m, tm)
    xp = _pad_rows(x2d, m_pad)
    y = pl.pallas_call(
        _mm_lrelu_kernel,
        out_shape=jax.ShapeDtypeStruct((m_pad, cp), jnp.bfloat16),
        grid=(m_pad // tm,),
        in_specs=[
            pl.BlockSpec((tm, k), lambda i: (i, 0)),
            pl.BlockSpec((k, cp), lambda i: (0, 0)),   # weight resident
        ],
        out_specs=pl.BlockSpec((tm, cp), lambda i: (i, 0)),
        compiler_params=_compiler_params(),
    )(xp, w2d)
    return y[:m]


def _call_mm_bn_lrelu(x2d, w2d, gamma, beta):
    m, k = x2d.shape
    cp = w2d.shape[1]
    tm = _choose_tm(m)
    m_pad = _round_up(m, tm)
    nsteps = m_pad // tm
    xp = _pad_rows(x2d, m_pad)

    # Pass 1: conv (f32 staged to HBM) + per-tile partial stats; fully tiled,
    # "parallel" grid, VMEM O(tm*cp).
    conv, stats = pl.pallas_call(
        _mm_stats_kernel,
        out_shape=(
            jax.ShapeDtypeStruct((m_pad, cp), jnp.float32),
            jax.ShapeDtypeStruct((nsteps, 8, cp), jnp.float32),
        ),
        grid=(nsteps,),
        in_specs=[
            pl.BlockSpec((tm, k), lambda i: (i, 0)),
            pl.BlockSpec((k, cp), lambda i: (0, 0)),   # weight resident
        ],
        out_specs=(
            pl.BlockSpec((tm, cp), lambda i: (i, 0)),
            pl.BlockSpec((1, 8, cp), lambda i: (i, 0, 0)),
        ),
        compiler_params=_compiler_params(),
    )(xp, w2d)

    # Combine partial stats in XLA (tiny). Padded rows are zero, so dividing
    # by the real M keeps training-mode batch statistics exact under tiling.
    tot = jnp.sum(stats, axis=0)                       # (8, cp)
    mean = tot[0] / m
    var = jnp.maximum(tot[1] / m - mean * mean, 0.0)
    # TODO(synk): E[x^2]-E[x]^2 in f32 can cancel when |mean| >> std; switch
    # to a centered/Welford combine if tighter tolerance is ever needed.
    inv_std = jax.lax.rsqrt(var + BN_EPS)
    scale = (gamma * inv_std).reshape(1, cp).astype(jnp.float32)
    shift = (beta - mean * gamma * inv_std).reshape(1, cp).astype(jnp.float32)

    # Pass 2: elementwise BN + LeakyReLU on the same f32 data the statistics
    # were computed from; tiled, "parallel".
    y = pl.pallas_call(
        _bn_lrelu_kernel,
        out_shape=jax.ShapeDtypeStruct((m_pad, cp), jnp.bfloat16),
        grid=(nsteps,),
        in_specs=[
            pl.BlockSpec((tm, cp), lambda i: (i, 0)),
            pl.BlockSpec((1, cp), lambda i: (0, 0)),   # scale resident
            pl.BlockSpec((1, cp), lambda i: (0, 0)),   # shift resident
        ],
        out_specs=pl.BlockSpec((tm, cp), lambda i: (i, 0)),
        compiler_params=_compiler_params(),
    )(conv, scale, shift)
    return y[:m]


def _call_dot1_sigmoid(x2d, w_row):
    m, k = x2d.shape
    tm = _choose_tm(m)
    m_pad = _round_up(m, tm)
    xp = _pad_rows(x2d, m_pad)
    y = pl.pallas_call(
        _dot1_sigmoid_kernel,
        out_shape=jax.ShapeDtypeStruct((m_pad, 1), jnp.float32),
        grid=(m_pad // tm,),
        in_specs=[
            pl.BlockSpec((tm, k), lambda i: (i, 0)),
            pl.BlockSpec((1, k), lambda i: (0, 0)),    # weight row resident
        ],
        out_specs=pl.BlockSpec((tm, 1), lambda i: (i, 0)),
        compiler_params=_compiler_params(),
    )(xp, w_row)
    return y[:m]


# ---------------------------------------------------------------------------
# Conv layer wrapper: im2col glue (bf16) + fused Pallas kernels.
# ---------------------------------------------------------------------------
def conv2d_pallas(x_nhwc, w_hwio, stride, pad, epilogue, gamma=None, beta=None):
    n, h, w_sp, cin = x_nhwc.shape
    kh, kw, cin_w, cout = w_hwio.shape
    assert cin == cin_w

    xb = x_nhwc.astype(jnp.bfloat16)
    if pad:
        xb = jnp.pad(xb, ((0, 0), (pad, pad), (pad, pad), (0, 0)))
    ho = (h + 2 * pad - kh) // stride + 1
    wo = (w_sp + 2 * pad - kw) // stride + 1

    # TODO(synk): im2col still materializes KH*KW shifted copies via XLA; move
    # to in-kernel per-tap accumulation from an HBM (pl.ANY) ref to cut traffic.
    cols = []
    for i in range(kh):
        for j in range(kw):
            cols.append(xb[:, i:i + ho * stride:stride, j:j + wo * stride:stride, :])
    patches = jnp.stack(cols, axis=3)                  # (N, Ho, Wo, KH*KW, Cin)
    m = n * ho * wo
    k = kh * kw * cin
    x2d = patches.reshape(m, k)                        # bf16, K left un-padded

    if epilogue == "sigmoid":
        assert cout == 1
        w_row = w_hwio.astype(jnp.float32).reshape(k, 1).T   # (1, k)
        y2d = _call_dot1_sigmoid(x2d, w_row)
        return y2d.reshape(n, ho, wo, cout)

    # Lane-dense output only when the write amplification stays <= 2x.
    cp = _round_up(cout, LANE) if cout >= LANE // 2 else cout
    w2d = w_hwio.astype(jnp.float32).reshape(k, cout)
    if cp != cout:
        w2d = jnp.pad(w2d, ((0, 0), (0, cp - cout)))
    w2d = w2d.astype(jnp.bfloat16)

    if epilogue == "lrelu":
        y2d = _call_mm_lrelu(x2d, w2d)
    elif epilogue == "bn_lrelu":
        g = gamma.astype(jnp.float32)
        b = beta.astype(jnp.float32)
        if cp != cout:
            g = jnp.pad(g, (0, cp - cout))
            b = jnp.pad(b, (0, cp - cout))
        y2d = _call_mm_bn_lrelu(x2d, w2d, g, b)
    else:
        raise ValueError(epilogue)

    return y2d[:, :cout].reshape(n, ho, wo, cout)


# ---------------------------------------------------------------------------
# Parameters (DCGAN-style init N(0, 0.02); BN affine: gamma=1, beta=0).
# ---------------------------------------------------------------------------
def init_discriminator_params(key, ndf=8):
    k1, k2, k3, k4 = jax.random.split(key, 4)
    std = 0.02

    def w(k, cin, cout):  # HWIO
        return std * jax.random.normal(k, (4, 4, cin, cout), dtype=jnp.float32)

    return {
        "w1": w(k1, 3, ndf),
        "w2": w(k2, ndf, 2 * ndf),
        "g2": jnp.ones((2 * ndf,), jnp.float32),
        "b2": jnp.zeros((2 * ndf,), jnp.float32),
        "w3": w(k3, 2 * ndf, 4 * ndf),
        "g3": jnp.ones((4 * ndf,), jnp.float32),
        "b3": jnp.zeros((4 * ndf,), jnp.float32),
        "w4": w(k4, 4 * ndf, 1),
    }


def discriminator_forward(x_nchw, params):
    """x_nchw: (N, 3, 32, 32) -> (N, 1, 1, 1), matching the PyTorch module.

    BatchNorm uses training-mode batch statistics (PyTorch train() default).
    """
    x = jnp.transpose(x_nchw, (0, 2, 3, 1))  # NCHW -> NHWC
    y = conv2d_pallas(x, params["w1"], stride=2, pad=1, epilogue="lrelu")
    y = conv2d_pallas(y, params["w2"], stride=2, pad=1, epilogue="bn_lrelu",
                      gamma=params["g2"], beta=params["b2"])
    y = conv2d_pallas(y, params["w3"], stride=2, pad=1, epilogue="bn_lrelu",
                      gamma=params["g3"], beta=params["b3"])
    y = conv2d_pallas(y, params["w4"], stride=1, pad=0, epilogue="sigmoid")
    return jnp.transpose(y.astype(jnp.float32), (0, 3, 1, 2))  # (N,1,1,1)


# ---------------------------------------------------------------------------
# Pure-JAX f32 reference for the in-script sanity check.
# ---------------------------------------------------------------------------
def reference_forward(x_nchw, params):
    x = jnp.transpose(x_nchw, (0, 2, 3, 1))

    def conv(x, w, stride, pad):
        return jax.lax.conv_general_dilated(
            x, w, window_strides=(stride, stride),
            padding=((pad, pad), (pad, pad)),
            dimension_numbers=("NHWC", "HWIO", "NHWC"),
        )

    def lrelu(y):
        return jnp.where(y > 0, y, LRELU_SLOPE * y)

    def bn(y, g, b):
        m = jnp.mean(y, axis=(0, 1, 2), keepdims=True)
        v = jnp.mean((y - m) ** 2, axis=(0, 1, 2), keepdims=True)
        return (y - m) * jax.lax.rsqrt(v + BN_EPS) * g + b

    y = lrelu(conv(x, params["w1"], 2, 1))
    y = lrelu(bn(conv(y, params["w2"], 2, 1), params["g2"], params["b2"]))
    y = lrelu(bn(conv(y, params["w3"], 2, 1), params["g3"], params["b3"]))
    y = jax.nn.sigmoid(conv(y, params["w4"], 1, 0))
    return jnp.transpose(y, (0, 3, 1, 2))


if __name__ == "__main__":
    key = jax.random.PRNGKey(0)
    kx, kp = jax.random.split(key)

    # DCGAN discriminator with final 4x4 valid conv -> 1x1 requires 32x32 input.
    N, C, H, W = 2, 3, 32, 32
    ndf = 8  # small for the demo; module default is 64
    x = jax.random.normal(kx, (N, C, H, W), dtype=jnp.float32)
    params = init_discriminator_params(kp, ndf=ndf)

    out = jax.block_until_ready(jax.jit(discriminator_forward)(x, params))
    assert out.shape == (N, 1, 1, 1), out.shape

    ref = jax.block_until_ready(reference_forward(x, params))
    np.testing.assert_allclose(np.asarray(out), np.asarray(ref), atol=2e-2, rtol=2e-2)

    print("KERNEL_OK")
</pallas_src>

<mosaic_0001>
module attributes {stable_mosaic.version = 11 : i64} {
  func.func @_mm_lrelu_kernel(%arg0: i32, %arg1: memref<512x48xbf16, #tpu.memory_space<vmem>>, %arg2: memref<48x8xbf16, #tpu.memory_space<vmem>>, %arg3: memref<512x8xbf16, #tpu.memory_space<vmem>>) attributes {dimension_semantics = [#tpu.dimension_semantics<parallel>], iteration_bounds = array<i64: 1>, scalar_prefetch = 0 : i64, scratch_operands = 0 : i64, tpu.core_type = #tpu.core_type<tc>, window_params = [{transform_indices = @transform_0, window_bounds = array<i64: 512, 48>}, {pipeline_mode = #tpu.pipeline_mode<synchronous>, transform_indices = @transform_1, window_bounds = array<i64: 48, 8>}, {transform_indices = @transform_2, window_bounds = array<i64: 512, 8>}]} {
    %c0 = arith.constant 0 : index
    %c0_0 = arith.constant 0 : index
    %0 = vector.load %arg1[%c0, %c0_0] : memref<512x48xbf16, #tpu.memory_space<vmem>>, vector<512x48xbf16>
    %c0_1 = arith.constant 0 : index
    %c0_2 = arith.constant 0 : index
    %1 = vector.load %arg2[%c0_1, %c0_2] : memref<48x8xbf16, #tpu.memory_space<vmem>>, vector<48x8xbf16>
    %cst = arith.constant dense<0.000000e+00> : vector<512x8xf32>
    %2 = tpu.matmul %0, %1, %cst {dimension_numbers = #tpu.dot_dimension_numbers<[1], [0], [0], [1], [0, 0, 1, 1], [], []>} : vector<512x48xbf16>, vector<48x8xbf16>, vector<512x8xf32> -> vector<512x8xf32>
    %cst_3 = arith.constant 0.000000e+00 : f32
    %3 = vector.broadcast %cst_3 : f32 to vector<512x8xf32>
    %4 = arith.cmpf ogt, %2, %3 : vector<512x8xf32>
    %cst_4 = arith.constant 2.000000e-01 : f32
    %5 = vector.broadcast %cst_4 : f32 to vector<512x8xf32>
    %6 = arith.mulf %5, %2 : vector<512x8xf32>
    %7 = arith.select %4, %2, %6 : vector<512x8xi1>, vector<512x8xf32>
    %8 = arith.truncf %7 : vector<512x8xf32> to vector<512x8xbf16>
    %c0_5 = arith.constant 0 : index
    %c0_6 = arith.constant 0 : index
    %9 = vector.load %arg3[%c0_5, %c0_6] : memref<512x8xbf16, #tpu.memory_space<vmem>>, vector<512x8xbf16>
    tpu.vector_store %arg3[%c0_5, %c0_6], %8 {strides = array<i32>} : memref<512x8xbf16, #tpu.memory_space<vmem>>, vector<512x8xbf16>,
    return
  }
  func.func @transform_0(%arg0: i32) -> (i32, i32) {
    %c0_i32 = arith.constant 0 : i32
    %c0_i32_0 = arith.constant 0 : i32
    return %arg0, %c0_i32 : i32, i32
  }
  func.func @transform_1(%arg0: i32) -> (i32, i32) {
    %c0_i32 = arith.constant 0 : i32
    %c0_i32_0 = arith.constant 0 : i32
    %c0_i32_1 = arith.constant 0 : i32
    return %c0_i32, %c0_i32_0 : i32, i32
  }
  func.func @transform_2(%arg0: i32) -> (i32, i32) {
    %c0_i32 = arith.constant 0 : i32
    %c0_i32_0 = arith.constant 0 : i32
    return %arg0, %c0_i32 : i32, i32
  }
}

module attributes {stable_mosaic.version = 11 : i64} {
  func.func @_mm_stats_kernel(%arg0: i32, %arg1: memref<128x128xbf16, #tpu.memory_space<vmem>>, %arg2: memref<128x16xbf16, #tpu.memory_space<vmem>>, %arg3: memref<128x16xf32, #tpu.memory_space<vmem>>, %arg4: memref<1x8x16xf32, #tpu.memory_space<vmem>>) attributes {dimension_semantics = [#tpu.dimension_semantics<parallel>], iteration_bounds = array<i64: 1>, scalar_prefetch = 0 : i64, scratch_operands = 0 : i64, tpu.core_type = #tpu.core_type<tc>, window_params = [{transform_indices = @transform_0, window_bounds = array<i64: 128, 128>}, {pipeline_mode = #tpu.pipeline_mode<synchronous>, transform_indices = @transform_1, window_bounds = array<i64: 128, 16>}, {transform_indices = @transform_2, window_bounds = array<i64: 128, 16>}, {transform_indices = @transform_3, window_bounds = array<i64: 1, 8, 16>}]} {
    %c0 = arith.constant 0 : index
    %c0_0 = arith.constant 0 : index
    %0 = vector.load %arg1[%c0, %c0_0] : memref<128x128xbf16, #tpu.memory_space<vmem>>, vector<128x128xbf16>
    %c0_1 = arith.constant 0 : index
    %c0_2 = arith.constant 0 : index
    %1 = vector.load %arg2[%c0_1, %c0_2] : memref<128x16xbf16, #tpu.memory_space<vmem>>, vector<128x16xbf16>
    %cst = arith.constant dense<0.000000e+00> : vector<128x16xf32>
    %2 = tpu.matmul %0, %1, %cst {dimension_numbers = #tpu.dot_dimension_numbers<[1], [0], [0], [1], [0, 0, 1, 1], [], []>} : vector<128x128xbf16>, vector<128x16xbf16>, vector<128x16xf32> -> vector<128x16xf32>
    %c0_3 = arith.constant 0 : index
    %c0_4 = arith.constant 0 : index
    %3 = vector.load %arg3[%c0_3, %c0_4] : memref<128x16xf32, #tpu.memory_space<vmem>>, vector<128x16xf32>
    tpu.vector_store %arg3[%c0_3, %c0_4], %2 {strides = array<i32>} : memref<128x16xf32, #tpu.memory_space<vmem>>, vector<128x16xf32>,
    %cst_5 = arith.constant dense<0.000000e+00> : vector<16xf32>
    %4 = vector.multi_reduction <add>, %2, %cst_5 [0] : vector<128x16xf32> to vector<16xf32>
    %5 = vector.shape_cast %4 : vector<16xf32> to vector<1x16xf32>
    %6 = arith.mulf %2, %2 : vector<128x16xf32>
    %cst_6 = arith.constant dense<0.000000e+00> : vector<16xf32>
    %7 = vector.multi_reduction <add>, %6, %cst_6 [0] : vector<128x16xf32> to vector<16xf32>
    %8 = vector.shape_cast %7 : vector<16xf32> to vector<1x16xf32>
    %cst_7 = arith.constant 0.000000e+00 : f32
    %9 = vector.broadcast %cst_7 : f32 to vector<6x16xf32>
    %10 = tpu.concatenate %5, %8, %9 in 0 : vector<1x16xf32>, vector<1x16xf32>, vector<6x16xf32> -> vector<8x16xf32>
    %11 = vector.shape_cast %10 : vector<8x16xf32> to vector<1x8x16xf32>
    %c0_8 = arith.constant 0 : index
    %c0_9 = arith.constant 0 : index
    %c0_10 = arith.constant 0 : index
    %12 = vector.load %arg4[%c0_8, %c0_9, %c0_10] : memref<1x8x16xf32, #tpu.memory_space<vmem>>, vector<1x8x16xf32>
    tpu.vector_store %arg4[%c0_8, %c0_9, %c0_10], %11 {strides = array<i32>} : memref<1x8x16xf32, #tpu.memory_space<vmem>>, vector<1x8x16xf32>,
    return
  }
  func.func @transform_0(%arg0: i32) -> (i32, i32) {
    %c0_i32 = arith.constant 0 : i32
    %c0_i32_0 = arith.constant 0 : i32
    return %arg0, %c0_i32 : i32, i32
  }
  func.func @transform_1(%arg0: i32) -> (i32, i32) {
    %c0_i32 = arith.constant 0 : i32
    %c0_i32_0 = arith.constant 0 : i32
    %c0_i32_1 = arith.constant 0 : i32
    return %c0_i32, %c0_i32_0 : i32, i32
  }
  func.func @transform_2(%arg0: i32) -> (i32, i32) {
    %c0_i32 = arith.constant 0 : i32
    %c0_i32_0 = arith.constant 0 : i32
    return %arg0, %c0_i32 : i32, i32
  }
  func.func @transform_3(%arg0: i32) -> (i32, i32, i32) {
    %c0_i32 = arith.constant 0 : i32
    %c0_i32_0 = arith.constant 0 : i32
    %c0_i32_1 = arith.constant 0 : i32
    return %arg0, %c0_i32, %c0_i32_0 : i32, i32, i32
  }
}

module attributes {stable_mosaic.version = 11 : i64} {
  func.func @_bn_lrelu_kernel(%arg0: i32, %arg1: memref<128x16xf32, #tpu.memory_space<vmem>>, %arg2: memref<1x16xf32, #tpu.memory_space<vmem>>, %arg3: memref<1x16xf32, #tpu.memory_space<vmem>>, %arg4: memref<128x16xbf16, #tpu.memory_space<vmem>>) attributes {dimension_semantics = [#tpu.dimension_semantics<parallel>], iteration_bounds = array<i64: 1>, scalar_prefetch = 0 : i64, scratch_operands = 0 : i64, tpu.core_type = #tpu.core_type<tc>, window_params = [{transform_indices = @transform_0, window_bounds = array<i64: 128, 16>}, {pipeline_mode = #tpu.pipeline_mode<synchronous>, transform_indices = @transform_1, window_bounds = array<i64: 1, 16>}, {pipeline_mode = #tpu.pipeline_mode<synchronous>, transform_indices = @transform_2, window_bounds = array<i64: 1, 16>}, {transform_indices = @transform_3, window_bounds = array<i64: 128, 16>}]} {
    %c0 = arith.constant 0 : index
    %c0_0 = arith.constant 0 : index
    %0 = vector.load %arg1[%c0, %c0_0] : memref<128x16xf32, #tpu.memory_space<vmem>>, vector<128x16xf32>
    %c0_1 = arith.constant 0 : index
    %c0_2 = arith.constant 0 : index
    %1 = vector.load %arg2[%c0_1, %c0_2] : memref<1x16xf32, #tpu.memory_space<vmem>>, vector<1x16xf32>
    %2 = vector.broadcast %1 : vector<1x16xf32> to vector<128x16xf32>
    %3 = arith.mulf %0, %2 : vector<128x16xf32>
    %c0_3 = arith.constant 0 : index
    %c0_4 = arith.constant 0 : index
    %4 = vector.load %arg3[%c0_3, %c0_4] : memref<1x16xf32, #tpu.memory_space<vmem>>, vector<1x16xf32>
    %5 = vector.broadcast %4 : vector<1x16xf32> to vector<128x16xf32>
    %6 = arith.addf %3, %5 : vector<128x16xf32>
    %cst = arith.constant 0.000000e+00 : f32
    %7 = vector.broadcast %cst : f32 to vector<128x16xf32>
    %8 = arith.cmpf ogt, %6, %7 : vector<128x16xf32>
    %cst_5 = arith.constant 2.000000e-01 : f32
    %9 = vector.broadcast %cst_5 : f32 to vector<128x16xf32>
    %10 = arith.mulf %9, %6 : vector<128x16xf32>
    %11 = arith.select %8, %6, %10 : vector<128x16xi1>, vector<128x16xf32>
    %12 = arith.truncf %11 : vector<128x16xf32> to vector<128x16xbf16>
    %c0_6 = arith.constant 0 : index
    %c0_7 = arith.constant 0 : index
    %13 = vector.load %arg4[%c0_6, %c0_7] : memref<128x16xbf16, #tpu.memory_space<vmem>>, vector<128x16xbf16>
    tpu.vector_store %arg4[%c0_6, %c0_7], %12 {strides = array<i32>} : memref<128x16xbf16, #tpu.memory_space<vmem>>, vector<128x16xbf16>,
    return
  }
  func.func @transform_0(%arg0: i32) -> (i32, i32) {
    %c0_i32 = arith.constant 0 : i32
    %c0_i32_0 = arith.constant 0 : i32
    return %arg0, %c0_i32 : i32, i32
  }
  func.func @transform_1(%arg0: i32) -> (i32, i32) {
    %c0_i32 = arith.constant 0 : i32
    %c0_i32_0 = arith.constant 0 : i32
    %c0_i32_1 = arith.constant 0 : i32
    return %c0_i32, %c0_i32_0 : i32, i32
  }
  func.func @transform_2(%arg0: i32) -> (i32, i32) {
    %c0_i32 = arith.constant 0 : i32
    %c0_i32_0 = arith.constant 0 : i32
    %c0_i32_1 = arith.constant 0 : i32
    return %c0_i32, %c0_i32_0 : i32, i32
  }
  func.func @transform_3(%arg0: i32) -> (i32, i32) {
    %c0_i32 = arith.constant 0 : i32
    %c0_i32_0 = arith.constant 0 : i32
    return %arg0, %c0_i32 : i32, i32
  }
}

module attributes {stable_mosaic.version = 11 : i64} {
  func.func @_mm_stats_kernel(%arg0: i32, %arg1: memref<32x256xbf16, #tpu.memory_space<vmem>>, %arg2: memref<256x32xbf16, #tpu.memory_space<vmem>>, %arg3: memref<32x32xf32, #tpu.memory_space<vmem>>, %arg4: memref<1x8x32xf32, #tpu.memory_space<vmem>>) attributes {dimension_semantics = [#tpu.dimension_semantics<parallel>], iteration_bounds = array<i64: 1>, scalar_prefetch = 0 : i64, scratch_operands = 0 : i64, tpu.core_type = #tpu.core_type<tc>, window_params = [{transform_indices = @transform_0, window_bounds = array<i64: 32, 256>}, {pipeline_mode = #tpu.pipeline_mode<synchronous>, transform_indices = @transform_1, window_bounds = array<i64: 256, 32>}, {transform_indices = @transform_2, window_bounds = array<i64: 32, 32>}, {transform_indices = @transform_3, window_bounds = array<i64: 1, 8, 32>}]} {
    %c0 = arith.constant 0 : index
    %c0_0 = arith.constant 0 : index
    %0 = vector.load %arg1[%c0, %c0_0] : memref<32x256xbf16, #tpu.memory_space<vmem>>, vector<32x256xbf16>
    %c0_1 = arith.constant 0 : index
    %c0_2 = arith.constant 0 : index
    %1 = vector.load %arg2[%c0_1, %c0_2] : memref<256x32xbf16, #tpu.memory_space<vmem>>, vector<256x32xbf16>
    %cst = arith.constant dense<0.000000e+00> : vector<32x32xf32>
    %2 = tpu.matmul %0, %1, %cst {dimension_numbers = #tpu.dot_dimension_numbers<[1], [0], [0], [1], [0, 0, 1, 1], [], []>} : vector<32x256xbf16>, vector<256x32xbf16>, vector<32x32xf32> -> vector<32x32xf32>
    %c0_3 = arith.constant 0 : index
    %c0_4 = arith.constant 0 : index
    %3 = vector.load %arg3[%c0_3, %c0_4] : memref<32x32xf32, #tpu.memory_space<vmem>>, vector<32x32xf32>
    tpu.vector_store %arg3[%c0_3, %c0_4], %2 {strides = array<i32>} : memref<32x32xf32, #tpu.memory_space<vmem>>, vector<32x32xf32>,
    %cst_5 = arith.constant dense<0.000000e+00> : vector<32xf32>
    %4 = vector.multi_reduction <add>, %2, %cst_5 [0] : vector<32x32xf32> to vector<32xf32>
    %5 = vector.shape_cast %4 : vector<32xf32> to vector<1x32xf32>
    %6 = arith.mulf %2, %2 : vector<32x32xf32>
    %cst_6 = arith.constant dense<0.000000e+00> : vector<32xf32>
    %7 = vector.multi_reduction <add>, %6, %cst_6 [0] : vector<32x32xf32> to vector<32xf32>
    %8 = vector.shape_cast %7 : vector<32xf32> to vector<1x32xf32>
    %cst_7 = arith.constant 0.000000e+00 : f32
    %9 = vector.broadcast %cst_7 : f32 to vector<6x32xf32>
    %10 = tpu.concatenate %5, %8, %9 in 0 : vector<1x32xf32>, vector<1x32xf32>, vector<6x32xf32> -> vector<8x32xf32>
    %11 = vector.shape_cast %10 : vector<8x32xf32> to vector<1x8x32xf32>
    %c0_8 = arith.constant 0 : index
    %c0_9 = arith.constant 0 : index
    %c0_10 = arith.constant 0 : index
    %12 = vector.load %arg4[%c0_8, %c0_9, %c0_10] : memref<1x8x32xf32, #tpu.memory_space<vmem>>, vector<1x8x32xf32>
    tpu.vector_store %arg4[%c0_8, %c0_9, %c0_10], %11 {strides = array<i32>} : memref<1x8x32xf32, #tpu.memory_space<vmem>>, vector<1x8x32xf32>,
    return
  }
  func.func @transform_0(%arg0: i32) -> (i32, i32) {
    %c0_i32 = arith.constant 0 : i32
    %c0_i32_0 = arith.constant 0 : i32
    return %arg0, %c0_i32 : i32, i32
  }
  func.func @transform_1(%arg0: i32) -> (i32, i32) {
    %c0_i32 = arith.constant 0 : i32
    %c0_i32_0 = arith.constant 0 : i32
    %c0_i32_1 = arith.constant 0 : i32
    return %c0_i32, %c0_i32_0 : i32, i32
  }
  func.func @transform_2(%arg0: i32) -> (i32, i32) {
    %c0_i32 = arith.constant 0 : i32
    %c0_i32_0 = arith.constant 0 : i32
    return %arg0, %c0_i32 : i32, i32
  }
  func.func @transform_3(%arg0: i32) -> (i32, i32, i32) {
    %c0_i32 = arith.constant 0 : i32
    %c0_i32_0 = arith.constant 0 : i32
    %c0_i32_1 = arith.constant 0 : i32
    return %arg0, %c0_i32, %c0_i32_0 : i32, i32, i32
  }
}

module attributes {stable_mosaic.version = 11 : i64} {
  func.func @_bn_lrelu_kernel(%arg0: i32, %arg1: memref<32x32xf32, #tpu.memory_space<vmem>>, %arg2: memref<1x32xf32, #tpu.memory_space<vmem>>, %arg3: memref<1x32xf32, #tpu.memory_space<vmem>>, %arg4: memref<32x32xbf16, #tpu.memory_space<vmem>>) attributes {dimension_semantics = [#tpu.dimension_semantics<parallel>], iteration_bounds = array<i64: 1>, scalar_prefetch = 0 : i64, scratch_operands = 0 : i64, tpu.core_type = #tpu.core_type<tc>, window_params = [{transform_indices = @transform_0, window_bounds = array<i64: 32, 32>}, {pipeline_mode = #tpu.pipeline_mode<synchronous>, transform_indices = @transform_1, window_bounds = array<i64: 1, 32>}, {pipeline_mode = #tpu.pipeline_mode<synchronous>, transform_indices = @transform_2, window_bounds = array<i64: 1, 32>}, {transform_indices = @transform_3, window_bounds = array<i64: 32, 32>}]} {
    %c0 = arith.constant 0 : index
    %c0_0 = arith.constant 0 : index
    %0 = vector.load %arg1[%c0, %c0_0] : memref<32x32xf32, #tpu.memory_space<vmem>>, vector<32x32xf32>
    %c0_1 = arith.constant 0 : index
    %c0_2 = arith.constant 0 : index
    %1 = vector.load %arg2[%c0_1, %c0_2] : memref<1x32xf32, #tpu.memory_space<vmem>>, vector<1x32xf32>
    %2 = vector.broadcast %1 : vector<1x32xf32> to vector<32x32xf32>
    %3 = arith.mulf %0, %2 : vector<32x32xf32>
    %c0_3 = arith.constant 0 : index
    %c0_4 = arith.constant 0 : index
    %4 = vector.load %arg3[%c0_3, %c0_4] : memref<1x32xf32, #tpu.memory_space<vmem>>, vector<1x32xf32>
    %5 = vector.broadcast %4 : vector<1x32xf32> to vector<32x32xf32>
    %6 = arith.addf %3, %5 : vector<32x32xf32>
    %cst = arith.constant 0.000000e+00 : f32
    %7 = vector.broadcast %cst : f32 to vector<32x32xf32>
    %8 = arith.cmpf ogt, %6, %7 : vector<32x32xf32>
    %cst_5 = arith.constant 2.000000e-01 : f32
    %9 = vector.broadcast %cst_5 : f32 to vector<32x32xf32>
    %10 = arith.mulf %9, %6 : vector<32x32xf32>
    %11 = arith.select %8, %6, %10 : vector<32x32xi1>, vector<32x32xf32>
    %12 = arith.truncf %11 : vector<32x32xf32> to vector<32x32xbf16>
    %c0_6 = arith.constant 0 : index
    %c0_7 = arith.constant 0 : index
    %13 = vector.load %arg4[%c0_6, %c0_7] : memref<32x32xbf16, #tpu.memory_space<vmem>>, vector<32x32xbf16>
    tpu.vector_store %arg4[%c0_6, %c0_7], %12 {strides = array<i32>} : memref<32x32xbf16, #tpu.memory_space<vmem>>, vector<32x32xbf16>,
    return
  }
  func.func @transform_0(%arg0: i32) -> (i32, i32) {
    %c0_i32 = arith.constant 0 : i32
    %c0_i32_0 = arith.constant 0 : i32
    return %arg0, %c0_i32 : i32, i32
  }
  func.func @transform_1(%arg0: i32) -> (i32, i32) {
    %c0_i32 = arith.constant 0 : i32
    %c0_i32_0 = arith.constant 0 : i32
    %c0_i32_1 = arith.constant 0 : i32
    return %c0_i32, %c0_i32_0 : i32, i32
  }
  func.func @transform_2(%arg0: i32) -> (i32, i32) {
    %c0_i32 = arith.constant 0 : i32
    %c0_i32_0 = arith.constant 0 : i32
    %c0_i32_1 = arith.constant 0 : i32
    return %c0_i32, %c0_i32_0 : i32, i32
  }
  func.func @transform_3(%arg0: i32) -> (i32, i32) {
    %c0_i32 = arith.constant 0 : i32
    %c0_i32_0 = arith.constant 0 : i32
    return %arg0, %c0_i32 : i32, i32
  }
}

module attributes {stable_mosaic.version = 11 : i64} {
  func.func @_dot1_sigmoid_kernel(%arg0: i32, %arg1: memref<8x512xbf16, #tpu.memory_space<vmem>>, %arg2: memref<1x512xf32, #tpu.memory_space<vmem>>, %arg3: memref<8x1xf32, #tpu.memory_space<vmem>>) attributes {dimension_semantics = [#tpu.dimension_semantics<parallel>], iteration_bounds = array<i64: 1>, scalar_prefetch = 0 : i64, scratch_operands = 0 : i64, tpu.core_type = #tpu.core_type<tc>, window_params = [{transform_indices = @transform_0, window_bounds = array<i64: 8, 512>}, {pipeline_mode = #tpu.pipeline_mode<synchronous>, transform_indices = @transform_1, window_bounds = array<i64: 1, 512>}, {transform_indices = @transform_2, window_bounds = array<i64: 8, 1>}]} {
    %c0 = arith.constant 0 : index
    %c0_0 = arith.constant 0 : index
    %0 = vector.load %arg1[%c0, %c0_0] : memref<8x512xbf16, #tpu.memory_space<vmem>>, vector<8x512xbf16>
    %1 = arith.extf %0 : vector<8x512xbf16> to vector<8x512xf32>
    %c0_1 = arith.constant 0 : index
    %c0_2 = arith.constant 0 : index
    %2 = vector.load %arg2[%c0_1, %c0_2] : memref<1x512xf32, #tpu.memory_space<vmem>>, vector<1x512xf32>
    %3 = vector.broadcast %2 : vector<1x512xf32> to vector<8x512xf32>
    %4 = arith.mulf %1, %3 : vector<8x512xf32>
    %cst = arith.constant dense<0.000000e+00> : vector<8xf32>
    %5 = vector.multi_reduction <add>, %4, %cst [1] : vector<8x512xf32> to vector<8xf32>
    %6 = vector.shape_cast %5 : vector<8xf32> to vector<8x1xf32>
    %7 = arith.negf %6 : vector<8x1xf32>
    %8 = math.exp %7 : vector<8x1xf32>
    %cst_3 = arith.constant 1.000000e+00 : f32
    %9 = vector.broadcast %cst_3 : f32 to vector<8x1xf32>
    %10 = arith.addf %9, %8 : vector<8x1xf32>
    %11 = arith.divf %9, %10 : vector<8x1xf32>
    %c0_4 = arith.constant 0 : index
    %c0_5 = arith.constant 0 : index
    %12 = vector.load %arg3[%c0_4, %c0_5] : memref<8x1xf32, #tpu.memory_space<vmem>>, vector<8x1xf32>
    tpu.vector_store %arg3[%c0_4, %c0_5], %11 {strides = array<i32>} : memref<8x1xf32, #tpu.memory_space<vmem>>, vector<8x1xf32>,
    return
  }
  func.func @transform_0(%arg0: i32) -> (i32, i32) {
    %c0_i32 = arith.constant 0 : i32
    %c0_i32_0 = arith.constant 0 : i32
    return %arg0, %c0_i32 : i32, i32
  }
  func.func @transform_1(%arg0: i32) -> (i32, i32) {
    %c0_i32 = arith.constant 0 : i32
    %c0_i32_0 = arith.constant 0 : i32
    %c0_i32_1 = arith.constant 0 : i32
    return %c0_i32, %c0_i32_0 : i32, i32
  }
  func.func @transform_2(%arg0: i32) -> (i32, i32) {
    %c0_i32 = arith.constant 0 : i32
    %c0_i32_0 = arith.constant 0 : i32
    return %arg0, %c0_i32 : i32, i32
  }
}

</mosaic_0001>

<llo_original>
// kernel: discriminator_forward.6
$region0: #{discriminator_forward.6}
  #allocation0 [shape = 'u32[]', space=smem, size = 0x4, offset = 0x4, fixed_abs, tag = 'smem constant byte address 0x4 - core index']
  #allocation1 [shape = 'u32[144,128]{1,0:T(1,128)}', space=vmem, size = 0x12000, scoped, tag = 'internal scratch']
  %s0 = inlined_call_operand.vmem [shape: bf16[512,48], index: 0, kind: input, shape index: {}]
  %s1 = inlined_call_operand.vmem [shape: bf16[48,8], index: 1, kind: input, shape index: {}]
  %s2 = inlined_call_operand.vmem [shape: bf16[512,8], index: 2, kind: output, shape index: {}]
  %s3 = sld [smem:[#allocation0]]
  $region18: #{discriminator_forward.6} parent=0
    _
  %s5 = ssub.s32 1, %s3
  %s6 = scalar_select 0, %s5, %s3
  // Predicated region
  $region2: #{discriminator_forward.6} parent=0 // pred_check
    _
  $region3: #{discriminator_forward.6} parent=0 // pred_check_branch
    %8 = sbr.rel (0) target = $region5
  $region4: #{discriminator_forward.6} parent=0 // pred_region
    _
  $region5: #{discriminator_forward.6} parent=0 // pred_fallthru
    _
  // Predicated region
  $region6: #{discriminator_forward.6} parent=0 // pred_check
    _
  $region7: #{discriminator_forward.6} parent=0 // pred_check_branch
    %10 = sbr.rel (0) target = $region9
  $region8: #{discriminator_forward.6} parent=0 // pred_region
    _
  $region9: #{discriminator_forward.6} parent=0 // pred_fallthru
    _
  %v12 = vld [vmem:[%s0] sm:$0xf]
  %v13 = vld [vmem:[%s0 + $0x4] sm:$0xf]
  %v14 = vld [vmem:[%s0 + $0x8] sm:$0xf]
  %v15 = vld [vmem:[%s0 + $0xc] sm:$0xf]
  %v16 = vld [vmem:[%s0 + $0x10] sm:$0xf]
  %v17 = vld [vmem:[%s0 + $0x14] sm:$0xf]
  %v18 = vld [vmem:[%s0 + $0x18] sm:$0xf]
  %v19 = vld [vmem:[%s0 + $0x1c] sm:$0xf]
  %v20 = vld [vmem:[%s0 + $0x20] sm:$0xf]
  %v21 = vld [vmem:[%s0 + $0x24] sm:$0xf]
  %v22 = vld [vmem:[%s0 + $0x28] sm:$0xf]
  %v23 = vld [vmem:[%s0 + $0x2c] sm:$0xf]
  %v24 = vld [vmem:[%s0 + $0x30] sm:$0xf]
  %v25 = vld [vmem:[%s0 + $0x34] sm:$0xf]
  %v26 = vld [vmem:[%s0 + $0x38] sm:$0xf]
  %v27 = vld [vmem:[%s0 + $0x3c] sm:$0xf]
  %v28 = vld [vmem:[%s0 + $0x40] sm:$0xf]
  %v29 = vld [vmem:[%s0 + $0x44] sm:$0xf]
  %v30 = vld [vmem:[%s0 + $0x48] sm:$0xf]
  %v31 = vld [vmem:[%s0 + $0x4c] sm:$0xf]
  %v32 = vld [vmem:[%s0 + $0x50] sm:$0xf]
  %v33 = vld [vmem:[%s0 + $0x54] sm:$0xf]
  %v34 = vld [vmem:[%s0 + $0x58] sm:$0xf]
  %v35 = vld [vmem:[%s0 + $0x5c] sm:$0xf]
  %v36 = vld [vmem:[%s0 + $0x60] sm:$0xf]
  %v37 = vld [vmem:[%s0 + $0x64] sm:$0xf]
  %v38 = vld [vmem:[%s0 + $0x68] sm:$0xf]
  %v39 = vld [vmem:[%s0 + $0x6c] sm:$0xf]
  %v40 = vld [vmem:[%s0 + $0x70] sm:$0xf]
  %v41 = vld [vmem:[%s0 + $0x74] sm:$0xf]
  %v42 = vld [vmem:[%s0 + $0x78] sm:$0xf]
  %v43 = vld [vmem:[%s0 + $0x7c] sm:$0xf]
  %v44 = vld [vmem:[%s0 + $0x80] sm:$0xf]
  %v45 = vld [vmem:[%s0 + $0x84] sm:$0xf]
  %v46 = vld [vmem:[%s0 + $0x88] sm:$0xf]
  %v47 = vld [vmem:[%s0 + $0x8c] sm:$0xf]
  %v48 = vld [vmem:[%s0 + $0x90] sm:$0xf]
  %v49 = vld [vmem:[%s0 + $0x94] sm:$0xf]
  %v50 = vld [vmem:[%s0 + $0x98] sm:$0xf]
  %v51 = vld [vmem:[%s0 + $0x9c] sm:$0xf]
  %v52 = vld [vmem:[%s0 + $0xa0] sm:$0xf]
  %v53 = vld [vmem:[%s0 + $0xa4] sm:$0xf]
  %v54 = vld [vmem:[%s0 + $0xa8] sm:$0xf]
  %v55 = vld [vmem:[%s0 + $0xac] sm:$0xf]
  %v56 = vld [vmem:[%s0 + $0xb0] sm:$0xf]
  %v57 = vld [vmem:[%s0 + $0xb4] sm:$0xf]
  %v58 = vld [vmem:[%s0 + $0xb8] sm:$0xf]
  %v59 = vld [vmem:[%s0 + $0xbc] sm:$0xf]
  %v60 = vld [vmem:[%s0 + $0xc0] sm:$0xf]
  %v61 = vld [vmem:[%s0 + $0xc4] sm:$0xf]
  %v62 = vld [vmem:[%s0 + $0xc8] sm:$0xf]
  %v63 = vld [vmem:[%s0 + $0xcc] sm:$0xf]
  %v64 = vld [vmem:[%s0 + $0xd0] sm:$0xf]
  %v65 = vld [vmem:[%s0 + $0xd4] sm:$0xf]
  %v66 = vld [vmem:[%s0 + $0xd8] sm:$0xf]
  %v67 = vld [vmem:[%s0 + $0xdc] sm:$0xf]
  %v68 = vld [vmem:[%s0 + $0xe0] sm:$0xf]
  %v69 = vld [vmem:[%s0 + $0xe4] sm:$0xf]
  %v70 = vld [vmem:[%s0 + $0xe8] sm:$0xf]
  %v71 = vld [vmem:[%s0 + $0xec] sm:$0xf]
  %v72 = vld [vmem:[%s0 + $0xf0] sm:$0xf]
  %v73 = vld [vmem:[%s0 + $0xf4] sm:$0xf]
  %v74 = vld [vmem:[%s0 + $0xf8] sm:$0xf]
  %v75 = vld [vmem:[%s0 + $0xfc] sm:$0xf]
  %v76 = vld [vmem:[%s1] sm:$0xf]
  %v77 = vld [vmem:[%s1 + $0x4] sm:$0xf]
  %v78 = vld [vmem:[%s1 + $0x8] sm:$0xf]
  %v79 = vld [vmem:[%s1 + $0xc] sm:$0xf]
  %v80 = vld [vmem:[%s1 + $0x10] sm:$0xf]
  %v81 = vld [vmem:[%s1 + $0x14] sm:$0xf]
  %v146 = vunpack.c.l.b16 %v12
  %v147 = vunpack.c.l.b16 %v13
  %v148 = vunpack.c.l.b16 %v14
  %v149 = vunpack.c.l.b16 %v15
  %v150 = vunpack.c.l.b16 %v16
  %v151 = vunpack.c.l.b16 %v17
  %v152 = vunpack.c.l.b16 %v18
  %v153 = vunpack.c.l.b16 %v19
  %v154 = vunpack.c.l.b16 %v20
  %v155 = vunpack.c.l.b16 %v21
  %v156 = vunpack.c.l.b16 %v22
  %v157 = vunpack.c.l.b16 %v23
  %v158 = vunpack.c.l.b16 %v24
  %v159 = vunpack.c.l.b16 %v25
  %v160 = vunpack.c.l.b16 %v26
  %v161 = vunpack.c.l.b16 %v27
  %v162 = vunpack.c.l.b16 %v28
  %v163 = vunpack.c.l.b16 %v29
  %v164 = vunpack.c.l.b16 %v30
  %v165 = vunpack.c.l.b16 %v31
  %v166 = vunpack.c.l.b16 %v32
  %v167 = vunpack.c.l.b16 %v33
  %v168 = vunpack.c.l.b16 %v34
  %v169 = vunpack.c.l.b16 %v35
  %v170 = vunpack.c.l.b16 %v36
  %v171 = vunpack.c.l.b16 %v37
  %v172 = vunpack.c.l.b16 %v38
  %v173 = vunpack.c.l.b16 %v39
  %v174 = vunpack.c.l.b16 %v40
  %v175 = vunpack.c.l.b16 %v41
  %v176 = vunpack.c.l.b16 %v42
  %v177 = vunpack.c.l.b16 %v43
  %v178 = vunpack.c.l.b16 %v44
  %v179 = vunpack.c.l.b16 %v45
  %v180 = vunpack.c.l.b16 %v46
  %v181 = vunpack.c.l.b16 %v47
  %v182 = vunpack.c.l.b16 %v48
  %v183 = vunpack.c.l.b16 %v49
  %v184 = vunpack.c.l.b16 %v50
  %v185 = vunpack.c.l.b16 %v51
  %v186 = vunpack.c.l.b16 %v52
  %v187 = vunpack.c.l.b16 %v53
  %v188 = vunpack.c.l.b16 %v54
  %v189 = vunpack.c.l.b16 %v55
  %v190 = vunpack.c.l.b16 %v56
  %v191 = vunpack.c.l.b16 %v57
  %v192 = vunpack.c.l.b16 %v58
  %v193 = vunpack.c.l.b16 %v59
  %v194 = vunpack.c.l.b16 %v60
  %v195 = vunpack.c.l.b16 %v61
  %v196 = vunpack.c.l.b16 %v62
  %v197 = vunpack.c.l.b16 %v63
  %v198 = vunpack.c.l.b16 %v64
  %v199 = vunpack.c.l.b16 %v65
  %v200 = vunpack.c.l.b16 %v66
  %v201 = vunpack.c.l.b16 %v67
  %v202 = vunpack.c.l.b16 %v68
  %v203 = vunpack.c.l.b16 %v69
  %v204 = vunpack.c.l.b16 %v70
  %v205 = vunpack.c.l.b16 %v71
  %v206 = vunpack.c.l.b16 %v72
  %v207 = vunpack.c.l.b16 %v73
  %v208 = vunpack.c.l.b16 %v74
  %v209 = vunpack.c.l.b16 %v75
  %v210 = vpack.c.b16 %v147, %v146
  %v211 = vpack.c.b16 %v149, %v148
  %v212 = vpack.c.b16 %v151, %v150
  %v213 = vpack.c.b16 %v153, %v152
  %v214 = vpack.c.b16 %v155, %v154
  %v215 = vpack.c.b16 %v157, %v156
  %v216 = vpack.c.b16 %v159, %v158
  %v217 = vpack.c.b16 %v161, %v160
  %v218 = vpack.c.b16 %v163, %v162
  %v219 = vpack.c.b16 %v165, %v164
  %v220 = vpack.c.b16 %v167, %v166
  %v221 = vpack.c.b16 %v169, %v168
  %v222 = vpack.c.b16 %v171, %v170
  %v223 = vpack.c.b16 %v173, %v172
  %v224 = vpack.c.b16 %v175, %v174
  %v225 = vpack.c.b16 %v177, %v176
  %v226 = vpack.c.b16 %v179, %v178
  %v227 = vpack.c.b16 %v181, %v180
  %v228 = vpack.c.b16 %v183, %v182
  %v229 = vpack.c.b16 %v185, %v184
  %v230 = vpack.c.b16 %v187, %v186
  %v231 = vpack.c.b16 %v189, %v188
  %v232 = vpack.c.b16 %v191, %v190
  %v233 = vpack.c.b16 %v193, %v192
  %v234 = vpack.c.b16 %v195, %v194
  %v235 = vpack.c.b16 %v197, %v196
  %v236 = vpack.c.b16 %v199, %v198
  %v237 = vpack.c.b16 %v201, %v200
  %v238 = vpack.c.b16 %v203, %v202
  %v239 = vpack.c.b16 %v205, %v204
  %v240 = vpack.c.b16 %v207, %v206
  %v241 = vpack.c.b16 %v209, %v208
  %v248 = vunpack.c.l.b16 %v76
  %v249 = vunpack.c.l.b16 %v77
  %v250 = vunpack.c.l.b16 %v78
  %v251 = vunpack.c.l.b16 %v79
  %v252 = vunpack.c.l.b16 %v80
  %v253 = vunpack.c.l.b16 %v81
  %v254 = vpack.c.b16 %v249, %v248
  %v255 = vpack.c.b16 %v251, %v250
  %v256 = vpack.c.b16 %v253, %v252
  %vm260 = vcmask 392192
  %v262 = vsel %vm260, %v210, 0
  %v265 = vsel %vm260, %v211, 0
  %v268 = vsel %vm260, %v212, 0
  %v271 = vsel %vm260, %v213, 0
  %v274 = vsel %vm260, %v214, 0
  %v277 = vsel %vm260, %v215, 0
  %v280 = vsel %vm260, %v216, 0
  %v283 = vsel %vm260, %v217, 0
  %v286 = vsel %vm260, %v218, 0
  %v289 = vsel %vm260, %v219, 0
  %v292 = vsel %vm260, %v220, 0
  %v295 = vsel %vm260, %v221, 0
  %v298 = vsel %vm260, %v222, 0
  %v301 = vsel %vm260, %v223, 0
  %v304 = vsel %vm260, %v224, 0
  %v307 = vsel %vm260, %v225, 0
  %v310 = vsel %vm260, %v226, 0
  %v313 = vsel %vm260, %v227, 0
  %v316 = vsel %vm260, %v228, 0
  %v319 = vsel %vm260, %v229, 0
  %v322 = vsel %vm260, %v230, 0
  %v325 = vsel %vm260, %v231, 0
  %v328 = vsel %vm260, %v232, 0
  %v331 = vsel %vm260, %v233, 0
  %v334 = vsel %vm260, %v234, 0
  %v337 = vsel %vm260, %v235, 0
  %v340 = vsel %vm260, %v236, 0
  %v343 = vsel %vm260, %v237, 0
  %v346 = vsel %vm260, %v238, 0
  %v349 = vsel %vm260, %v239, 0
  %v352 = vsel %vm260, %v240, 0
  %v355 = vsel %vm260, %v241, 0
  %357 = vmatprep.subr.bf16.mxu0 0
  %358 = vmatpush1.bf16.msra.mxu0 %v254
  %359 = vmatprep.subr.bf16.mxu0 0
  %360 = vmatpush1.bf16.msra.mxu0 %v255
  %361 = vmatprep.subr.bf16.mxu0 0
  %362 = vmatpush1.bf16.msra.mxu0 %v256
  %363 = vmatprep.subr.bf16.mxu0 0
  %364 = vmatpush1.bf16.msra.mxu0 0
  %365 = vmatprep.subr.bf16.mxu0 0
  %366 = vmatpush1.bf16.msra.mxu0 0
  %367 = vmatprep.subr.bf16.mxu0 0
  %368 = vmatpush1.bf16.msra.mxu0 0
  %369 = vmatprep.subr.bf16.mxu0 0
  %370 = vmatpush1.bf16.msra.mxu0 0
  %371 = vmatprep.subr.bf16.mxu0 0
  %372 = vmatpush1.bf16.msra.mxu0 0
  %373 = vmatprep.subr.bf16.mxu0 0
  %374 = vmatpush1.bf16.msra.mxu0 0
  %375 = vmatprep.subr.bf16.mxu0 0
  %376 = vmatpush1.bf16.msra.mxu0 0
  %377 = vmatprep.subr.bf16.mxu0 0
  %378 = vmatpush1.bf16.msra.mxu0 0
  %379 = vmatprep.subr.bf16.mxu0 0
  %380 = vmatpush1.bf16.msra.mxu0 0
  %381 = vmatprep.subr.bf16.mxu0 0
  %382 = vmatpush1.bf16.msra.mxu0 0
  %383 = vmatprep.subr.bf16.mxu0 0
  %384 = vmatpush1.bf16.msra.mxu0 0
  %385 = vmatprep.subr.bf16.mxu0 0
  %386 = vmatpush1.bf16.msra.mxu0 0
  %387 = vmatprep.subr.bf16.mxu0 0
  %388 = vmatpush1.bf16.msra.mxu0 0
  %389 = vmatprep.mubr.bf16.mxu0 0
  %390 = vmatmul.mubr.bf16.gmra.mrb[0].mxu0 %v262
  %v391 = vpop.f32.mrb[0].mxu0
  %v392 = vadd.f32 0.0, %v391
  %v393 = vpop.f32.mrb[0].mxu0
  %v394 = vpop.f32.mrb[0].mxu0
  %v395 = vadd.f32 0.0, %v394
  %v396 = vpop.f32.mrb[0].mxu0
  %397 = vmatprep.mubr.bf16.mxu0 0
  %398 = vmatmul.mubr.bf16.gmra.mrb[0].mxu0 %v265
  %v399 = vpop.f32.mrb[0].mxu0
  %v400 = vadd.f32 0.0, %v399
  %v401 = vpop.f32.mrb[0].mxu0
  %v402 = vpop.f32.mrb[0].mxu0
  %v403 = vadd.f32 0.0, %v402
  %v404 = vpop.f32.mrb[0].mxu0
  %405 = vmatprep.mubr.bf16.mxu0 0
  %406 = vmatmul.mubr.bf16.gmra.mrb[0].mxu0 %v268
  %v407 = vpop.f32.mrb[0].mxu0
  %v408 = vadd.f32 0.0, %v407
  %v409 = vpop.f32.mrb[0].mxu0
  %v410 = vpop.f32.mrb[0].mxu0
  %v411 = vadd.f32 0.0, %v410
  %v412 = vpop.f32.mrb[0].mxu0
  %413 = vmatprep.mubr.bf16.mxu0 0
  %414 = vmatmul.mubr.bf16.gmra.mrb[0].mxu0 %v271
  %v415 = vpop.f32.mrb[0].mxu0
  %v416 = vadd.f32 0.0, %v415
  %v417 = vpop.f32.mrb[0].mxu0
  %v418 = vpop.f32.mrb[0].mxu0
  %v419 = vadd.f32 0.0, %v418
  %v420 = vpop.f32.mrb[0].mxu0
  %421 = vmatprep.mubr.bf16.mxu0 0
  %422 = vmatmul.mubr.bf16.gmra.mrb[0].mxu0 %v274
  %v423 = vpop.f32.mrb[0].mxu0
  %v424 = vadd.f32 0.0, %v423
  %v425 = vpop.f32.mrb[0].mxu0
  %v426 = vpop.f32.mrb[0].mxu0
  %v427 = vadd.f32 0.0, %v426
  %v428 = vpop.f32.mrb[0].mxu0
  %429 = vmatprep.mubr.bf16.mxu0 0
  %430 = vmatmul.mubr.bf16.gmra.mrb[0].mxu0 %v277
  %v431 = vpop.f32.mrb[0].mxu0
  %v432 = vadd.f32 0.0, %v431
  %v433 = vpop.f32.mrb[0].mxu0
  %v434 = vpop.f32.mrb[0].mxu0
  %v435 = vadd.f32 0.0, %v434
  %v436 = vpop.f32.mrb[0].mxu0
  %437 = vmatprep.mubr.bf16.mxu0 0
  %438 = vmatmul.mubr.bf16.gmra.mrb[0].mxu0 %v280
  %v439 = vpop.f32.mrb[0].mxu0
  %v440 = vadd.f32 0.0, %v439
  %v441 = vpop.f32.mrb[0].mxu0
  %v442 = vpop.f32.mrb[0].mxu0
  %v443 = vadd.f32 0.0, %v442
  %v444 = vpop.f32.mrb[0].mxu0
  %445 = vmatprep.mubr.bf16.mxu0 0
  %446 = vmatmul.mubr.bf16.gmra.mrb[0].mxu0 %v283
  %v447 = vpop.f32.mrb[0].mxu0
  %v448 = vadd.f32 0.0, %v447
  %v449 = vpop.f32.mrb[0].mxu0
  %v450 = vpop.f32.mrb[0].mxu0
  %v451 = vadd.f32 0.0, %v450
  %v452 = vpop.f32.mrb[0].mxu0
  %453 = vmatprep.mubr.bf16.mxu0 0
  %454 = vmatmul.mubr.bf16.gmra.mrb[0].mxu0 %v286
  %v455 = vpop.f32.mrb[0].mxu0
  %v456 = vadd.f32 0.0, %v455
  %v457 = vpop.f32.mrb[0].mxu0
  %v458 = vpop.f32.mrb[0].mxu0
  %v459 = vadd.f32 0.0, %v458
  %v460 = vpop.f32.mrb[0].mxu0
  %461 = vmatprep.mubr.bf16.mxu0 0
  %462 = vmatmul.mubr.bf16.gmra.mrb[0].mxu0 %v289
  %v463 = vpop.f32.mrb[0].mxu0
  %v464 = vadd.f32 0.0, %v463
  %v465 = vpop.f32.mrb[0].mxu0
  %v466 = vpop.f32.mrb[0].mxu0
  %v467 = vadd.f32 0.0, %v466
  %v468 = vpop.f32.mrb[0].mxu0
  %469 = vmatprep.mubr.bf16.mxu0 0
  %470 = vmatmul.mubr.bf16.gmra.mrb[0].mxu0 %v292
  %v471 = vpop.f32.mrb[0].mxu0
  %v472 = vadd.f32 0.0, %v471
  %v473 = vpop.f32.mrb[0].mxu0
  %v474 = vpop.f32.mrb[0].mxu0
  %v475 = vadd.f32 0.0, %v474
  %v476 = vpop.f32.mrb[0].mxu0
  %477 = vmatprep.mubr.bf16.mxu0 0
  %478 = vmatmul.mubr.bf16.gmra.mrb[0].mxu0 %v295
  %v479 = vpop.f32.mrb[0].mxu0
  %v480 = vadd.f32 0.0, %v479
  %v481 = vpop.f32.mrb[0].mxu0
  %v482 = vpop.f32.mrb[0].mxu0
  %v483 = vadd.f32 0.0, %v482
  %v484 = vpop.f32.mrb[0].mxu0
  %485 = vmatprep.mubr.bf16.mxu0 0
  %486 = vmatmul.mubr.bf16.gmra.mrb[0].mxu0 %v298
  %v487 = vpop.f32.mrb[0].mxu0
  %v488 = vadd.f32 0.0, %v487
  %v489 = vpop.f32.mrb[0].mxu0
  %v490 = vpop.f32.mrb[0].mxu0
  %v491 = vadd.f32 0.0, %v490
  %v492 = vpop.f32.mrb[0].mxu0
  %493 = vmatprep.mubr.bf16.mxu0 0
  %494 = vmatmul.mubr.bf16.gmra.mrb[0].mxu0 %v301
  %v495 = vpop.f32.mrb[0].mxu0
  %v496 = vadd.f32 0.0, %v495
  %v497 = vpop.f32.mrb[0].mxu0
  %v498 = vpop.f32.mrb[0].mxu0
  %v499 = vadd.f32 0.0, %v498
  %v500 = vpop.f32.mrb[0].mxu0
  %501 = vmatprep.mubr.bf16.mxu0 0
  %502 = vmatmul.mubr.bf16.gmra.mrb[0].mxu0 %v304
  %v503 = vpop.f32.mrb[0].mxu0
  %v504 = vadd.f32 0.0, %v503
  %v505 = vpop.f32.mrb[0].mxu0
  %v506 = vpop.f32.mrb[0].mxu0
  %v507 = vadd.f32 0.0, %v506
  %v508 = vpop.f32.mrb[0].mxu0
  %509 = vmatprep.mubr.bf16.mxu0 0
  %510 = vmatmul.mubr.bf16.gmra.mrb[0].mxu0 %v307
  %v511 = vpop.f32.mrb[0].mxu0
  %v512 = vadd.f32 0.0, %v511
  %v513 = vpop.f32.mrb[0].mxu0
  %v514 = vpop.f32.mrb[0].mxu0
  %v515 = vadd.f32 0.0, %v514
  %v516 = vpop.f32.mrb[0].mxu0
  %517 = vmatprep.mubr.bf16.mxu0 0
  %518 = vmatmul.mubr.bf16.gmra.mrb[0].mxu0 %v310
  %v519 = vpop.f32.mrb[0].mxu0
  %v520 = vadd.f32 0.0, %v519
  %v521 = vpop.f32.mrb[0].mxu0
  %v522 = vpop.f32.mrb[0].mxu0
  %v523 = vadd.f32 0.0, %v522
  %v524 = vpop.f32.mrb[0].mxu0
  %525 = vmatprep.mubr.bf16.mxu0 0
  %526 = vmatmul.mubr.bf16.gmra.mrb[0].mxu0 %v313
  %v527 = vpop.f32.mrb[0].mxu0
  %v528 = vadd.f32 0.0, %v527
  %v529 = vpop.f32.mrb[0].mxu0
  %v530 = vpop.f32.mrb[0].mxu0
  %v531 = vadd.f32 0.0, %v530
  %v532 = vpop.f32.mrb[0].mxu0
  %533 = vmatprep.mubr.bf16.mxu0 0
  %534 = vmatmul.mubr.bf16.gmra.mrb[0].mxu0 %v316
  %v535 = vpop.f32.mrb[0].mxu0
  %v536 = vadd.f32 0.0, %v535
  %v537 = vpop.f32.mrb[0].mxu0
  %v538 = vpop.f32.mrb[0].mxu0
  %v539 = vadd.f32 0.0, %v538
  %v540 = vpop.f32.mrb[0].mxu0
  %541 = vmatprep.mubr.bf16.mxu0 0
  %542 = vmatmul.mubr.bf16.gmra.mrb[0].mxu0 %v319
  %v543 = vpop.f32.mrb[0].mxu0
  %v544 = vadd.f32 0.0, %v543
  %v545 = vpop.f32.mrb[0].mxu0
  %v546 = vpop.f32.mrb[0].mxu0
  %v547 = vadd.f32 0.0, %v546
  %v548 = vpop.f32.mrb[0].mxu0
  %549 = vmatprep.mubr.bf16.mxu0 0
  %550 = vmatmul.mubr.bf16.gmra.mrb[0].mxu0 %v322
  %v551 = vpop.f32.mrb[0].mxu0
  %v552 = vadd.f32 0.0, %v551
  %v553 = vpop.f32.mrb[0].mxu0
  %v554 = vpop.f32.mrb[0].mxu0
  %v555 = vadd.f32 0.0, %v554
  %v556 = vpop.f32.mrb[0].mxu0
  %557 = vmatprep.mubr.bf16.mxu0 0
  %558 = vmatmul.mubr.bf16.gmra.mrb[0].mxu0 %v325
  %v559 = vpop.f32.mrb[0].mxu0
  %v560 = vadd.f32 0.0, %v559
  %v561 = vpop.f32.mrb[0].mxu0
  %v562 = vpop.f32.mrb[0].mxu0
  %v563 = vadd.f32 0.0, %v562
  %v564 = vpop.f32.mrb[0].mxu0
  %565 = vmatprep.mubr.bf16.mxu0 0
  %566 = vmatmul.mubr.bf16.gmra.mrb[0].mxu0 %v328
  %v567 = vpop.f32.mrb[0].mxu0
  %v568 = vadd.f32 0.0, %v567
  %v569 = vpop.f32.mrb[0].mxu0
  %v570 = vpop.f32.mrb[0].mxu0
  %v571 = vadd.f32 0.0, %v570
  %v572 = vpop.f32.mrb[0].mxu0
  %573 = vmatprep.mubr.bf16.mxu0 0
  %574 = vmatmul.mubr.bf16.gmra.mrb[0].mxu0 %v331
  %v575 = vpop.f32.mrb[0].mxu0
  %v576 = vadd.f32 0.0, %v575
  %v577 = vpop.f32.mrb[0].mxu0
  %v578 = vpop.f32.mrb[0].mxu0
  %v579 = vadd.f32 0.0, %v578
  %v580 = vpop.f32.mrb[0].mxu0
  %581 = vmatprep.mubr.bf16.mxu0 0
  %582 = vmatmul.mubr.bf16.gmra.mrb[0].mxu0 %v334
  %v583 = vpop.f32.mrb[0].mxu0
  %v584 = vadd.f32 0.0, %v583
  %v585 = vpop.f32.mrb[0].mxu0
  %v586 = vpop.f32.mrb[0].mxu0
  %v587 = vadd.f32 0.0, %v586
  %v588 = vpop.f32.mrb[0].mxu0
  %589 = vmatprep.mubr.bf16.mxu0 0
  %590 = vmatmul.mubr.bf16.gmra.mrb[0].mxu0 %v337
  %v591 = vpop.f32.mrb[0].mxu0
  %v592 = vadd.f32 0.0, %v591
  %v593 = vpop.f32.mrb[0].mxu0
  %v594 = vpop.f32.mrb[0].mxu0
  %v595 = vadd.f32 0.0, %v594
  %v596 = vpop.f32.mrb[0].mxu0
  %597 = vmatprep.mubr.bf16.mxu0 0
  %598 = vmatmul.mubr.bf16.gmra.mrb[0].mxu0 %v340
  %v599 = vpop.f32.mrb[0].mxu0
  %v600 = vadd.f32 0.0, %v599
  %v601 = vpop.f32.mrb[0].mxu0
  %v602 = vpop.f32.mrb[0].mxu0
  %v603 = vadd.f32 0.0, %v602
  %v604 = vpop.f32.mrb[0].mxu0
  %605 = vmatprep.mubr.bf16.mxu0 0
  %606 = vmatmul.mubr.bf16.gmra.mrb[0].mxu0 %v343
  %v607 = vpop.f32.mrb[0].mxu0
  %v608 = vadd.f32 0.0, %v607
  %v609 = vpop.f32.mrb[0].mxu0
  %v610 = vpop.f32.mrb[0].mxu0
  %v611 = vadd.f32 0.0, %v610
  %v612 = vpop.f32.mrb[0].mxu0
  %613 = vmatprep.mubr.bf16.mxu0 0
  %614 = vmatmul.mubr.bf16.gmra.mrb[0].mxu0 %v346
  %v615 = vpop.f32.mrb[0].mxu0
  %v616 = vadd.f32 0.0, %v615
  %v617 = vpop.f32.mrb[0].mxu0
  %v618 = vpop.f32.mrb[0].mxu0
  %v619 = vadd.f32 0.0, %v618
  %v620 = vpop.f32.mrb[0].mxu0
  %621 = vmatprep.mubr.bf16.mxu0 0
  %622 = vmatmul.mubr.bf16.gmra.mrb[0].mxu0 %v349
  %v623 = vpop.f32.mrb[0].mxu0
  %v624 = vadd.f32 0.0, %v623
  %v625 = vpop.f32.mrb[0].mxu0
  %v626 = vpop.f32.mrb[0].mxu0
  %v627 = vadd.f32 0.0, %v626
  %v628 = vpop.f32.mrb[0].mxu0
  %629 = vmatprep.mubr.bf16.mxu0 0
  %630 = vmatmul.mubr.bf16.gmra.mrb[0].mxu0 %v352
  %v631 = vpop.f32.mrb[0].mxu0
  %v632 = vadd.f32 0.0, %v631
  %v633 = vpop.f32.mrb[0].mxu0
  %v634 = vpop.f32.mrb[0].mxu0
  %v635 = vadd.f32 0.0, %v634
  %v636 = vpop.f32.mrb[0].mxu0
  %637 = vmatprep.mubr.bf16.mxu0 0
  %638 = vmatmul.mubr.bf16.gmra.mrb[0].mxu0 %v355
  %v639 = vpop.f32.mrb[0].mxu0
  %v640 = vadd.f32 0.0, %v639
  %v641 = vpop.f32.mrb[0].mxu0
  %v642 = vpop.f32.mrb[0].mxu0
  %v643 = vadd.f32 0.0, %v642
  %v644 = vpop.f32.mrb[0].mxu0
  %645 = vdwg.mxu0
  %vm646 = vcmp.gt.f32.partialorder %v392, 0.0
  %vm647 = vcmp.gt.f32.partialorder %v395, 0.0
  %vm648 = vcmp.gt.f32.partialorder %v400, 0.0
  %vm649 = vcmp.gt.f32.partialorder %v403, 0.0
  %vm650 = vcmp.gt.f32.partialorder %v408, 0.0
  %vm651 = vcmp.gt.f32.partialorder %v411, 0.0
  %vm652 = vcmp.gt.f32.partialorder %v416, 0.0
  %vm653 = vcmp.gt.f32.partialorder %v419, 0.0
  %vm654 = vcmp.gt.f32.partialorder %v424, 0.0
  %vm655 = vcmp.gt.f32.partialorder %v427, 0.0
  %vm656 = vcmp.gt.f32.partialorder %v432, 0.0
  %vm657 = vcmp.gt.f32.partialorder %v435, 0.0
  %vm658 = vcmp.gt.f32.partialorder %v440, 0.0
  %vm659 = vcmp.gt.f32.partialorder %v443, 0.0
  %vm660 = vcmp.gt.f32.partialorder %v448, 0.0
  %vm661 = vcmp.gt.f32.partialorder %v451, 0.0
  %vm662 = vcmp.gt.f32.partialorder %v456, 0.0
  %vm663 = vcmp.gt.f32.partialorder %v459, 0.0
  %vm664 = vcmp.gt.f32.partialorder %v464, 0.0
  %vm665 = vcmp.gt.f32.partialorder %v467, 0.0
  %vm666 = vcmp.gt.f32.partialorder %v472, 0.0
  %vm667 = vcmp.gt.f32.partialorder %v475, 0.0
  %vm668 = vcmp.gt.f32.partialorder %v480, 0.0
  %vm669 = vcmp.gt.f32.partialorder %v483, 0.0
  %vm670 = vcmp.gt.f32.partialorder %v488, 0.0
  %vm671 = vcmp.gt.f32.partialorder %v491, 0.0
  %vm672 = vcmp.gt.f32.partialorder %v496, 0.0
  %vm673 = vcmp.gt.f32.partialorder %v499, 0.0
  %vm674 = vcmp.gt.f32.partialorder %v504, 0.0
  %vm675 = vcmp.gt.f32.partialorder %v507, 0.0
  %vm676 = vcmp.gt.f32.partialorder %v512, 0.0
  %vm677 = vcmp.gt.f32.partialorder %v515, 0.0
  %vm678 = vcmp.gt.f32.partialorder %v520, 0.0
  %vm679 = vcmp.gt.f32.partialorder %v523, 0.0
  %vm680 = vcmp.gt.f32.partialorder %v528, 0.0
  %vm681 = vcmp.gt.f32.partialorder %v531, 0.0
  %vm682 = vcmp.gt.f32.partialorder %v536, 0.0
  %vm683 = vcmp.gt.f32.partialorder %v539, 0.0
  %vm684 = vcmp.gt.f32.partialorder %v544, 0.0
  %vm685 = vcmp.gt.f32.partialorder %v547, 0.0
  %vm686 = vcmp.gt.f32.partialorder %v552, 0.0
  %vm687 = vcmp.gt.f32.partialorder %v555, 0.0
  %vm688 = vcmp.gt.f32.partialorder %v560, 0.0
  %vm689 = vcmp.gt.f32.partialorder %v563, 0.0
  %vm690 = vcmp.gt.f32.partialorder %v568, 0.0
  %vm691 = vcmp.gt.f32.partialorder %v571, 0.0
  %vm692 = vcmp.gt.f32.partialorder %v576, 0.0
  %vm693 = vcmp.gt.f32.partialorder %v579, 0.0
  %vm694 = vcmp.gt.f32.partialorder %v584, 0.0
  %vm695 = vcmp.gt.f32.partialorder %v587, 0.0
  %vm696 = vcmp.gt.f32.partialorder %v592, 0.0
  %vm697 = vcmp.gt.f32.partialorder %v595, 0.0
  %vm698 = vcmp.gt.f32.partialorder %v600, 0.0
  %vm699 = vcmp.gt.f32.partialorder %v603, 0.0
  %vm700 = vcmp.gt.f32.partialorder %v608, 0.0
  %vm701 = vcmp.gt.f32.partialorder %v611, 0.0
  %vm702 = vcmp.gt.f32.partialorder %v616, 0.0
  %vm703 = vcmp.gt.f32.partialorder %v619, 0.0
  %vm704 = vcmp.gt.f32.partialorder %v624, 0.0
  %vm705 = vcmp.gt.f32.partialorder %v627, 0.0
  %vm706 = vcmp.gt.f32.partialorder %v632, 0.0
  %vm707 = vcmp.gt.f32.partialorder %v635, 0.0
  %vm708 = vcmp.gt.f32.partialorder %v640, 0.0
  %vm709 = vcmp.gt.f32.partialorder %v643, 0.0
  %v710 = vmul.f32 %v392, 0.2
  %v711 = vmul.f32 %v395, 0.2
  %v712 = vmul.f32 %v400, 0.2
  %v713 = vmul.f32 %v403, 0.2
  %v714 = vmul.f32 %v408, 0.2
  %v715 = vmul.f32 %v411, 0.2
  %v716 = vmul.f32 %v416, 0.2
  %v717 = vmul.f32 %v419, 0.2
  %v718 = vmul.f32 %v424, 0.2
  %v719 = vmul.f32 %v427, 0.2
  %v720 = vmul.f32 %v432, 0.2
  %v721 = vmul.f32 %v435, 0.2
  %v722 = vmul.f32 %v440, 0.2
  %v723 = vmul.f32 %v443, 0.2
  %v724 = vmul.f32 %v448, 0.2
  %v725 = vmul.f32 %v451, 0.2
  %v726 = vmul.f32 %v456, 0.2
  %v727 = vmul.f32 %v459, 0.2
  %v728 = vmul.f32 %v464, 0.2
  %v729 = vmul.f32 %v467, 0.2
  %v730 = vmul.f32 %v472, 0.2
  %v731 = vmul.f32 %v475, 0.2
  %v732 = vmul.f32 %v480, 0.2
  %v733 = vmul.f32 %v483, 0.2
  %v734 = vmul.f32 %v488, 0.2
  %v735 = vmul.f32 %v491, 0.2
  %v736 = vmul.f32 %v496, 0.2
  %v737 = vmul.f32 %v499, 0.2
  %v738 = vmul.f32 %v504, 0.2
  %v739 = vmul.f32 %v507, 0.2
  %v740 = vmul.f32 %v512, 0.2
  %v741 = vmul.f32 %v515, 0.2
  %v742 = vmul.f32 %v520, 0.2
  %v743 = vmul.f32 %v523, 0.2
  %v744 = vmul.f32 %v528, 0.2
  %v745 = vmul.f32 %v531, 0.2
  %v746 = vmul.f32 %v536, 0.2
  %v747 = vmul.f32 %v539, 0.2
  %v748 = vmul.f32 %v544, 0.2
  %v749 = vmul.f32 %v547, 0.2
  %v750 = vmul.f32 %v552, 0.2
  %v751 = vmul.f32 %v555, 0.2
  %v752 = vmul.f32 %v560, 0.2
  %v753 = vmul.f32 %v563, 0.2
  %v754 = vmul.f32 %v568, 0.2
  %v755 = vmul.f32 %v571, 0.2
  %v756 = vmul.f32 %v576, 0.2
  %v757 = vmul.f32 %v579, 0.2
  %v758 = vmul.f32 %v584, 0.2
  %v759 = vmul.f32 %v587, 0.2
  %v760 = vmul.f32 %v592, 0.2
  %v761 = vmul.f32 %v595, 0.2
  %v762 = vmul.f32 %v600, 0.2
  %v763 = vmul.f32 %v603, 0.2
  %v764 = vmul.f32 %v608, 0.2
  %v765 = vmul.f32 %v611, 0.2
  %v766 = vmul.f32 %v616, 0.2
  %v767 = vmul.f32 %v619, 0.2
  %v768 = vmul.f32 %v624, 0.2
  %v769 = vmul.f32 %v627, 0.2
  %v770 = vmul.f32 %v632, 0.2
  %v771 = vmul.f32 %v635, 0.2
  %v772 = vmul.f32 %v640, 0.2
  %v773 = vmul.f32 %v643, 0.2
  %v774 = vsel %vm646, %v392, %v710
  %v775 = vsel %vm647, %v395, %v711
  %v776 = vsel %vm648, %v400, %v712
  %v777 = vsel %vm649, %v403, %v713
  %v778 = vsel %vm650, %v408, %v714
  %v779 = vsel %vm651, %v411, %v715
  %v780 = vsel %vm652, %v416, %v716
  %v781 = vsel %vm653, %v419, %v717
  %v782 = vsel %vm654, %v424, %v718
  %v783 = vsel %vm655, %v427, %v719
  %v784 = vsel %vm656, %v432, %v720
  %v785 = vsel %vm657, %v435, %v721
  %v786 = vsel %vm658, %v440, %v722
  %v787 = vsel %vm659, %v443, %v723
  %v788 = vsel %vm660, %v448, %v724
  %v789 = vsel %vm661, %v451, %v725
  %v790 = vsel %vm662, %v456, %v726
  %v791 = vsel %vm663, %v459, %v727
  %v792 = vsel %vm664, %v464, %v728
  %v793 = vsel %vm665, %v467, %v729
  %v794 = vsel %vm666, %v472, %v730
  %v795 = vsel %vm667, %v475, %v731
  %v796 = vsel %vm668, %v480, %v732
  %v797 = vsel %vm669, %v483, %v733
  %v798 = vsel %vm670, %v488, %v734
  %v799 = vsel %vm671, %v491, %v735
  %v800 = vsel %vm672, %v496, %v736
  %v801 = vsel %vm673, %v499, %v737
  %v802 = vsel %vm674, %v504, %v738
  %v803 = vsel %vm675, %v507, %v739
  %v804 = vsel %vm676, %v512, %v740
  %v805 = vsel %vm677, %v515, %v741
  %v806 = vsel %vm678, %v520, %v742
  %v807 = vsel %vm679, %v523, %v743
  %v808 = vsel %vm680, %v528, %v744
  %v809 = vsel %vm681, %v531, %v745
  %v810 = vsel %vm682, %v536, %v746
  %v811 = vsel %vm683, %v539, %v747
  %v812 = vsel %vm684, %v544, %v748
  %v813 = vsel %vm685, %v547, %v749
  %v814 = vsel %vm686, %v552, %v750
  %v815 = vsel %vm687, %v555, %v751
  %v816 = vsel %vm688, %v560, %v752
  %v817 = vsel %vm689, %v563, %v753
  %v818 = vsel %vm690, %v568, %v754
  %v819 = vsel %vm691, %v571, %v755
  %v820 = vsel %vm692, %v576, %v756
  %v821 = vsel %vm693, %v579, %v757
  %v822 = vsel %vm694, %v584, %v758
  %v823 = vsel %vm695, %v587, %v759
  %v824 = vsel %vm696, %v592, %v760
  %v825 = vsel %vm697, %v595, %v761
  %v826 = vsel %vm698, %v600, %v762
  %v827 = vsel %vm699, %v603, %v763
  %v828 = vsel %vm700, %v608, %v764
  %v829 = vsel %vm701, %v611, %v765
  %v830 = vsel %vm702, %v616, %v766
  %v831 = vsel %vm703, %v619, %v767
  %v832 = vsel %vm704, %v624, %v768
  %v833 = vsel %vm705, %v627, %v769
  %v834 = vsel %vm706, %v632, %v770
  %v835 = vsel %vm707, %v635, %v771
  %v836 = vsel %vm708, %v640, %v772
  %v837 = vsel %vm709, %v643, %v773
  %v838 = vpack.c.bf16 %v775, %v774
  %v839 = vpack.c.bf16 %v777, %v776
  %v840 = vpack.c.bf16 %v779, %v778
  %v841 = vpack.c.bf16 %v781, %v780
  %v842 = vpack.c.bf16 %v783, %v782
  %v843 = vpack.c.bf16 %v785, %v784
  %v844 = vpack.c.bf16 %v787, %v786
  %v845 = vpack.c.bf16 %v789, %v788
  %v846 = vpack.c.bf16 %v791, %v790
  %v847 = vpack.c.bf16 %v793, %v792
  %v848 = vpack.c.bf16 %v795, %v794
  %v849 = vpack.c.bf16 %v797, %v796
  %v850 = vpack.c.bf16 %v799, %v798
  %v851 = vpack.c.bf16 %v801, %v800
  %v852 = vpack.c.bf16 %v803, %v802
  %v853 = vpack.c.bf16 %v805, %v804
  %v854 = vpack.c.bf16 %v807, %v806
  %v855 = vpack.c.bf16 %v809, %v808
  %v856 = vpack.c.bf16 %v811, %v810
  %v857 = vpack.c.bf16 %v813, %v812
  %v858 = vpack.c.bf16 %v815, %v814
  %v859 = vpack.c.bf16 %v817, %v816
  %v860 = vpack.c.bf16 %v819, %v818
  %v861 = vpack.c.bf16 %v821, %v820
  %v862 = vpack.c.bf16 %v823, %v822
  %v863 = vpack.c.bf16 %v825, %v824
  %v864 = vpack.c.bf16 %v827, %v826
  %v865 = vpack.c.bf16 %v829, %v828
  %v866 = vpack.c.bf16 %v831, %v830
  %v867 = vpack.c.bf16 %v833, %v832
  %v868 = vpack.c.bf16 %v835, %v834
  %v869 = vpack.c.bf16 %v837, %v836
  %v902 = vunpack.c.l.b16 %v838
  %v903 = vunpack.c.h.b16 %v838
  %v904 = vunpack.c.l.b16 %v839
  %v905 = vunpack.c.h.b16 %v839
  %v906 = vunpack.c.l.b16 %v840
  %v907 = vunpack.c.h.b16 %v840
  %v908 = vunpack.c.l.b16 %v841
  %v909 = vunpack.c.h.b16 %v841
  %v910 = vunpack.c.l.b16 %v842
  %v911 = vunpack.c.h.b16 %v842
  %v912 = vunpack.c.l.b16 %v843
  %v913 = vunpack.c.h.b16 %v843
  %v914 = vunpack.c.l.b16 %v844
  %v915 = vunpack.c.h.b16 %v844
  %v916 = vunpack.c.l.b16 %v845
  %v917 = vunpack.c.h.b16 %v845
  %v918 = vunpack.c.l.b16 %v846
  %v919 = vunpack.c.h.b16 %v846
  %v920 = vunpack.c.l.b16 %v847
  %v921 = vunpack.c.h.b16 %v847
  %v922 = vunpack.c.l.b16 %v848
  %v923 = vunpack.c.h.b16 %v848
  %v924 = vunpack.c.l.b16 %v849
  %v925 = vunpack.c.h.b16 %v849
  %v926 = vunpack.c.l.b16 %v850
  %v927 = vunpack.c.h.b16 %v850
  %v928 = vunpack.c.l.b16 %v851
  %v929 = vunpack.c.h.b16 %v851
  %v930 = vunpack.c.l.b16 %v852
  %v931 = vunpack.c.h.b16 %v852
  %v932 = vunpack.c.l.b16 %v853
  %v933 = vunpack.c.h.b16 %v853
  %v934 = vunpack.c.l.b16 %v854
  %v935 = vunpack.c.h.b16 %v854
  %v936 = vunpack.c.l.b16 %v855
  %v937 = vunpack.c.h.b16 %v855
  %v938 = vunpack.c.l.b16 %v856
  %v939 = vunpack.c.h.b16 %v856
  %v940 = vunpack.c.l.b16 %v857
  %v941 = vunpack.c.h.b16 %v857
  %v942 = vunpack.c.l.b16 %v858
  %v943 = vunpack.c.h.b16 %v858
  %v944 = vunpack.c.l.b16 %v859
  %v945 = vunpack.c.h.b16 %v859
  %v946 = vunpack.c.l.b16 %v860
  %v947 = vunpack.c.h.b16 %v860
  %v948 = vunpack.c.l.b16 %v861
  %v949 = vunpack.c.h.b16 %v861
  %v950 = vunpack.c.l.b16 %v862
  %v951 = vunpack.c.h.b16 %v862
  %v952 = vunpack.c.l.b16 %v863
  %v953 = vunpack.c.h.b16 %v863
  %v954 = vunpack.c.l.b16 %v864
  %v955 = vunpack.c.h.b16 %v864
  %v956 = vunpack.c.l.b16 %v865
  %v957 = vunpack.c.h.b16 %v865
  %v958 = vunpack.c.l.b16 %v866
  %v959 = vunpack.c.h.b16 %v866
  %v960 = vunpack.c.l.b16 %v867
  %v961 = vunpack.c.h.b16 %v867
  %v962 = vunpack.c.l.b16 %v868
  %v963 = vunpack.c.h.b16 %v868
  %v964 = vunpack.c.l.b16 %v869
  %v965 = vunpack.c.h.b16 %v869
  %v966 = vpack.c.b16 %v902, %v902
  %v967 = vpack.c.b16 %v903, %v903
  %v968 = vpack.c.b16 %v904, %v904
  %v969 = vpack.c.b16 %v905, %v905
  %v970 = vpack.c.b16 %v906, %v906
  %v971 = vpack.c.b16 %v907, %v907
  %v972 = vpack.c.b16 %v908, %v908
  %v973 = vpack.c.b16 %v909, %v909
  %v974 = vpack.c.b16 %v910, %v910
  %v975 = vpack.c.b16 %v911, %v911
  %v976 = vpack.c.b16 %v912, %v912
  %v977 = vpack.c.b16 %v913, %v913
  %v978 = vpack.c.b16 %v914, %v914
  %v979 = vpack.c.b16 %v915, %v915
  %v980 = vpack.c.b16 %v916, %v916
  %v981 = vpack.c.b16 %v917, %v917
  %v982 = vpack.c.b16 %v918, %v918
  %v983 = vpack.c.b16 %v919, %v919
  %v984 = vpack.c.b16 %v920, %v920
  %v985 = vpack.c.b16 %v921, %v921
  %v986 = vpack.c.b16 %v922, %v922
  %v987 = vpack.c.b16 %v923, %v923
  %v988 = vpack.c.b16 %v924, %v924
  %v989 = vpack.c.b16 %v925, %v925
  %v990 = vpack.c.b16 %v926, %v926
  %v991 = vpack.c.b16 %v927, %v927
  %v992 = vpack.c.b16 %v928, %v928
  %v993 = vpack.c.b16 %v929, %v929
  %v994 = vpack.c.b16 %v930, %v930
  %v995 = vpack.c.b16 %v931, %v931
  %v996 = vpack.c.b16 %v932, %v932
  %v997 = vpack.c.b16 %v933, %v933
  %v998 = vpack.c.b16 %v934, %v934
  %v999 = vpack.c.b16 %v935, %v935
  %v1000 = vpack.c.b16 %v936, %v936
  %v1001 = vpack.c.b16 %v937, %v937
  %v1002 = vpack.c.b16 %v938, %v938
  %v1003 = vpack.c.b16 %v939, %v939
  %v1004 = vpack.c.b16 %v940, %v940
  %v1005 = vpack.c.b16 %v941, %v941
  %v1006 = vpack.c.b16 %v942, %v942
  %v1007 = vpack.c.b16 %v943, %v943
  %v1008 = vpack.c.b16 %v944, %v944
  %v1009 = vpack.c.b16 %v945, %v945
  %v1010 = vpack.c.b16 %v946, %v946
  %v1011 = vpack.c.b16 %v947, %v947
  %v1012 = vpack.c.b16 %v948, %v948
  %v1013 = vpack.c.b16 %v949, %v949
  %v1014 = vpack.c.b16 %v950, %v950
  %v1015 = vpack.c.b16 %v951, %v951
  %v1016 = vpack.c.b16 %v952, %v952
  %v1017 = vpack.c.b16 %v953, %v953
  %v1018 = vpack.c.b16 %v954, %v954
  %v1019 = vpack.c.b16 %v955, %v955
  %v1020 = vpack.c.b16 %v956, %v956
  %v1021 = vpack.c.b16 %v957, %v957
  %v1022 = vpack.c.b16 %v958, %v958
  %v1023 = vpack.c.b16 %v959, %v959
  %v1024 = vpack.c.b16 %v960, %v960
  %v1025 = vpack.c.b16 %v961, %v961
  %v1026 = vpack.c.b16 %v962, %v962
  %v1027 = vpack.c.b16 %v963, %v963
  %v1028 = vpack.c.b16 %v964, %v964
  %v1029 = vpack.c.b16 %v965, %v965
  %vm1094 = vcmask 60416
  %1095 = vst.msk [vmem:[%s2] sm:$0xf] %vm1094, %v966
  %1096 = vst.msk [vmem:[%s2 + $0x4] sm:$0xf] %vm1094, %v967
  %1097 = vst.msk [vmem:[%s2 + $0x8] sm:$0xf] %vm1094, %v968
  %1098 = vst.msk [vmem:[%s2 + $0xc] sm:$0xf] %vm1094, %v969
  %1099 = vst.msk [vmem:[%s2 + $0x10] sm:$0xf] %vm1094, %v970
  %1100 = vst.msk [vmem:[%s2 + $0x14] sm:$0xf] %vm1094, %v971
  %1101 = vst.msk [vmem:[%s2 + $0x18] sm:$0xf] %vm1094, %v972
  %1102 = vst.msk [vmem:[%s2 + $0x1c] sm:$0xf] %vm1094, %v973
  %1103 = vst.msk [vmem:[%s2 + $0x20] sm:$0xf] %vm1094, %v974
  %1104 = vst.msk [vmem:[%s2 + $0x24] sm:$0xf] %vm1094, %v975
  %1105 = vst.msk [vmem:[%s2 + $0x28] sm:$0xf] %vm1094, %v976
  %1106 = vst.msk [vmem:[%s2 + $0x2c] sm:$0xf] %vm1094, %v977
  %1107 = vst.msk [vmem:[%s2 + $0x30] sm:$0xf] %vm1094, %v978
  %1108 = vst.msk [vmem:[%s2 + $0x34] sm:$0xf] %vm1094, %v979
  %1109 = vst.msk [vmem:[%s2 + $0x38] sm:$0xf] %vm1094, %v980
  %1110 = vst.msk [vmem:[%s2 + $0x3c] sm:$0xf] %vm1094, %v981
  %1111 = vst.msk [vmem:[%s2 + $0x40] sm:$0xf] %vm1094, %v982
  %1112 = vst.msk [vmem:[%s2 + $0x44] sm:$0xf] %vm1094, %v983
  %1113 = vst.msk [vmem:[%s2 + $0x48] sm:$0xf] %vm1094, %v984
  %1114 = vst.msk [vmem:[%s2 + $0x4c] sm:$0xf] %vm1094, %v985
  %1115 = vst.msk [vmem:[%s2 + $0x50] sm:$0xf] %vm1094, %v986
  %1116 = vst.msk [vmem:[%s2 + $0x54] sm:$0xf] %vm1094, %v987
  %1117 = vst.msk [vmem:[%s2 + $0x58] sm:$0xf] %vm1094, %v988
  %1118 = vst.msk [vmem:[%s2 + $0x5c] sm:$0xf] %vm1094, %v989
  %1119 = vst.msk [vmem:[%s2 + $0x60] sm:$0xf] %vm1094, %v990
  %1120 = vst.msk [vmem:[%s2 + $0x64] sm:$0xf] %vm1094, %v991
  %1121 = vst.msk [vmem:[%s2 + $0x68] sm:$0xf] %vm1094, %v992
  %1122 = vst.msk [vmem:[%s2 + $0x6c] sm:$0xf] %vm1094, %v993
  %1123 = vst.msk [vmem:[%s2 + $0x70] sm:$0xf] %vm1094, %v994
  %1124 = vst.msk [vmem:[%s2 + $0x74] sm:$0xf] %vm1094, %v995
  %1125 = vst.msk [vmem:[%s2 + $0x78] sm:$0xf] %vm1094, %v996
  %1126 = vst.msk [vmem:[%s2 + $0x7c] sm:$0xf] %vm1094, %v997
  %1127 = vst.msk [vmem:[%s2 + $0x80] sm:$0xf] %vm1094, %v998
  %1128 = vst.msk [vmem:[%s2 + $0x84] sm:$0xf] %vm1094, %v999
  %1129 = vst.msk [vmem:[%s2 + $0x88] sm:$0xf] %vm1094, %v1000
  %1130 = vst.msk [vmem:[%s2 + $0x8c] sm:$0xf] %vm1094, %v1001
  %1131 = vst.msk [vmem:[%s2 + $0x90] sm:$0xf] %vm1094, %v1002
  %1132 = vst.msk [vmem:[%s2 + $0x94] sm:$0xf] %vm1094, %v1003
  %1133 = vst.msk [vmem:[%s2 + $0x98] sm:$0xf] %vm1094, %v1004
  %1134 = vst.msk [vmem:[%s2 + $0x9c] sm:$0xf] %vm1094, %v1005
  %1135 = vst.msk [vmem:[%s2 + $0xa0] sm:$0xf] %vm1094, %v1006
  %1136 = vst.msk [vmem:[%s2 + $0xa4] sm:$0xf] %vm1094, %v1007
  %1137 = vst.msk [vmem:[%s2 + $0xa8] sm:$0xf] %vm1094, %v1008
  %1138 = vst.msk [vmem:[%s2 + $0xac] sm:$0xf] %vm1094, %v1009
  %1139 = vst.msk [vmem:[%s2 + $0xb0] sm:$0xf] %vm1094, %v1010
  %1140 = vst.msk [vmem:[%s2 + $0xb4] sm:$0xf] %vm1094, %v1011
  %1141 = vst.msk [vmem:[%s2 + $0xb8] sm:$0xf] %vm1094, %v1012
  %1142 = vst.msk [vmem:[%s2 + $0xbc] sm:$0xf] %vm1094, %v1013
  %1143 = vst.msk [vmem:[%s2 + $0xc0] sm:$0xf] %vm1094, %v1014
  %1144 = vst.msk [vmem:[%s2 + $0xc4] sm:$0xf] %vm1094, %v1015
  %1145 = vst.msk [vmem:[%s2 + $0xc8] sm:$0xf] %vm1094, %v1016
  %1146 = vst.msk [vmem:[%s2 + $0xcc] sm:$0xf] %vm1094, %v1017
  %1147 = vst.msk [vmem:[%s2 + $0xd0] sm:$0xf] %vm1094, %v1018
  %1148 = vst.msk [vmem:[%s2 + $0xd4] sm:$0xf] %vm1094, %v1019
  %1149 = vst.msk [vmem:[%s2 + $0xd8] sm:$0xf] %vm1094, %v1020
  %1150 = vst.msk [vmem:[%s2 + $0xdc] sm:$0xf] %vm1094, %v1021
  %1151 = vst.msk [vmem:[%s2 + $0xe0] sm:$0xf] %vm1094, %v1022
  %1152 = vst.msk [vmem:[%s2 + $0xe4] sm:$0xf] %vm1094, %v1023
  %1153 = vst.msk [vmem:[%s2 + $0xe8] sm:$0xf] %vm1094, %v1024
  %1154 = vst.msk [vmem:[%s2 + $0xec] sm:$0xf] %vm1094, %v1025
  %1155 = vst.msk [vmem:[%s2 + $0xf0] sm:$0xf] %vm1094, %v1026
  %1156 = vst.msk [vmem:[%s2 + $0xf4] sm:$0xf] %vm1094, %v1027
  %1157 = vst.msk [vmem:[%s2 + $0xf8] sm:$0xf] %vm1094, %v1028
  %1158 = vst.msk [vmem:[%s2 + $0xfc] sm:$0xf] %vm1094, %v1029
  // Predicated region
  $region10: #{discriminator_forward.6} parent=0 // pred_check
    _
  $region11: #{discriminator_forward.6} parent=0 // pred_check_branch
    %1160 = sbr.rel (0) target = $region13
  $region12: #{discriminator_forward.6} parent=0 // pred_region
    _
  $region13: #{discriminator_forward.6} parent=0 // pred_fallthru
    _
  // Predicated region
  $region14: #{discriminator_forward.6} parent=0 // pred_check
    _
  $region15: #{discriminator_forward.6} parent=0 // pred_check_branch
    %1162 = sbr.rel (0) target = $region17
  $region16: #{discriminator_forward.6} parent=0 // pred_region
    _
  $region17: #{discriminator_forward.6} parent=0 // pred_fallthru
    _

// kernel: discriminator_forward.7
$region0: #{discriminator_forward.7}
  #allocation0 [shape = 'u32[]', space=smem, size = 0x4, offset = 0x4, fixed_abs, tag = 'smem constant byte address 0x4 - core index']
  #allocation1 [shape = 'u32[144,128]{1,0:T(1,128)}', space=vmem, size = 0x12000, scoped, tag = 'internal scratch']
  %s0 = inlined_call_operand.vmem [shape: bf16[128,128], index: 0, kind: input, shape index: {}]
  %s1 = inlined_call_operand.vmem [shape: bf16[128,16], index: 1, kind: input, shape index: {}]
  %s2 = inlined_call_operand.vmem [shape: f32[128,16], index: 2, kind: output, shape index: {0}]
  %s3 = inlined_call_operand.vmem [shape: f32[1,8,16], index: 3, kind: output, shape index: {1}]
  %4 = xla_tuple %s2, %s3
  %s5 = sld [smem:[#allocation0]]
  $region26: #{discriminator_forward.7} parent=0
    _
  %s7 = ssub.s32 1, %s5
  %s8 = scalar_select 0, %s7, %s5
  // Predicated region
  $region2: #{discriminator_forward.7} parent=0 // pred_check
    _
  $region3: #{discriminator_forward.7} parent=0 // pred_check_branch
    %10 = sbr.rel (0) target = $region5
  $region4: #{discriminator_forward.7} parent=0 // pred_region
    _
  $region5: #{discriminator_forward.7} parent=0 // pred_fallthru
    _
  // Predicated region
  $region6: #{discriminator_forward.7} parent=0 // pred_check
    _
  $region7: #{discriminator_forward.7} parent=0 // pred_check_branch
    %12 = sbr.rel (0) target = $region9
  $region8: #{discriminator_forward.7} parent=0 // pred_region
    _
  $region9: #{discriminator_forward.7} parent=0 // pred_fallthru
    _
  %v14 = vld [vmem:[%s0] sm:$0xf]
  %v15 = vld [vmem:[%s0 + $0x4] sm:$0xf]
  %v16 = vld [vmem:[%s0 + $0x8] sm:$0xf]
  %v17 = vld [vmem:[%s0 + $0xc] sm:$0xf]
  %v18 = vld [vmem:[%s0 + $0x10] sm:$0xf]
  %v19 = vld [vmem:[%s0 + $0x14] sm:$0xf]
  %v20 = vld [vmem:[%s0 + $0x18] sm:$0xf]
  %v21 = vld [vmem:[%s0 + $0x1c] sm:$0xf]
  %v22 = vld [vmem:[%s0 + $0x20] sm:$0xf]
  %v23 = vld [vmem:[%s0 + $0x24] sm:$0xf]
  %v24 = vld [vmem:[%s0 + $0x28] sm:$0xf]
  %v25 = vld [vmem:[%s0 + $0x2c] sm:$0xf]
  %v26 = vld [vmem:[%s0 + $0x30] sm:$0xf]
  %v27 = vld [vmem:[%s0 + $0x34] sm:$0xf]
  %v28 = vld [vmem:[%s0 + $0x38] sm:$0xf]
  %v29 = vld [vmem:[%s0 + $0x3c] sm:$0xf]
  %v30 = vld [vmem:[%s1] sm:$0xf]
  %v31 = vld [vmem:[%s1 + $0x4] sm:$0xf]
  %v32 = vld [vmem:[%s1 + $0x8] sm:$0xf]
  %v33 = vld [vmem:[%s1 + $0xc] sm:$0xf]
  %v34 = vld [vmem:[%s1 + $0x10] sm:$0xf]
  %v35 = vld [vmem:[%s1 + $0x14] sm:$0xf]
  %v36 = vld [vmem:[%s1 + $0x18] sm:$0xf]
  %v37 = vld [vmem:[%s1 + $0x1c] sm:$0xf]
  %v38 = vld [vmem:[%s1 + $0x20] sm:$0xf]
  %v39 = vld [vmem:[%s1 + $0x24] sm:$0xf]
  %v40 = vld [vmem:[%s1 + $0x28] sm:$0xf]
  %v41 = vld [vmem:[%s1 + $0x2c] sm:$0xf]
  %v42 = vld [vmem:[%s1 + $0x30] sm:$0xf]
  %v43 = vld [vmem:[%s1 + $0x34] sm:$0xf]
  %v44 = vld [vmem:[%s1 + $0x38] sm:$0xf]
  %v45 = vld [vmem:[%s1 + $0x3c] sm:$0xf]
  %v62 = vunpack.c.l.b16 %v14
  %v63 = vunpack.c.l.b16 %v15
  %v64 = vunpack.c.l.b16 %v16
  %v65 = vunpack.c.l.b16 %v17
  %v66 = vunpack.c.l.b16 %v18
  %v67 = vunpack.c.l.b16 %v19
  %v68 = vunpack.c.l.b16 %v20
  %v69 = vunpack.c.l.b16 %v21
  %v70 = vunpack.c.l.b16 %v22
  %v71 = vunpack.c.l.b16 %v23
  %v72 = vunpack.c.l.b16 %v24
  %v73 = vunpack.c.l.b16 %v25
  %v74 = vunpack.c.l.b16 %v26
  %v75 = vunpack.c.l.b16 %v27
  %v76 = vunpack.c.l.b16 %v28
  %v77 = vunpack.c.l.b16 %v29
  %v78 = vpack.c.b16 %v63, %v62
  %v79 = vpack.c.b16 %v65, %v64
  %v80 = vpack.c.b16 %v67, %v66
  %v81 = vpack.c.b16 %v69, %v68
  %v82 = vpack.c.b16 %v71, %v70
  %v83 = vpack.c.b16 %v73, %v72
  %v84 = vpack.c.b16 %v75, %v74
  %v85 = vpack.c.b16 %v77, %v76
  %v110 = vunpack.c.l.b16 %v30
  %v111 = vunpack.c.l.b16 %v31
  %v112 = vunpack.c.l.b16 %v32
  %v113 = vunpack.c.l.b16 %v33
  %v114 = vunpack.c.l.b16 %v34
  %v115 = vunpack.c.l.b16 %v35
  %v116 = vunpack.c.l.b16 %v36
  %v117 = vunpack.c.l.b16 %v37
  %v118 = vunpack.c.l.b16 %v38
  %v119 = vunpack.c.l.b16 %v39
  %v120 = vunpack.c.l.b16 %v40
  %v121 = vunpack.c.l.b16 %v41
  %v122 = vunpack.c.l.b16 %v42
  %v123 = vunpack.c.l.b16 %v43
  %v124 = vunpack.c.l.b16 %v44
  %v125 = vunpack.c.l.b16 %v45
  %v126 = vpack.c.b16 %v111, %v110
  %v127 = vpack.c.b16 %v113, %v112
  %v128 = vpack.c.b16 %v115, %v114
  %v129 = vpack.c.b16 %v117, %v116
  %v130 = vpack.c.b16 %v119, %v118
  %v131 = vpack.c.b16 %v121, %v120
  %v132 = vpack.c.b16 %v123, %v122
  %v133 = vpack.c.b16 %v125, %v124
  %142 = vmatprep.subr.bf16.mxu0 0
  %143 = vmatpush1.bf16.msra.mxu0 %v126
  %144 = vmatprep.subr.bf16.mxu0 0
  %145 = vmatpush1.bf16.msra.mxu0 %v127
  %146 = vmatprep.subr.bf16.mxu0 0
  %147 = vmatpush1.bf16.msra.mxu0 %v128
  %148 = vmatprep.subr.bf16.mxu0 0
  %149 = vmatpush1.bf16.msra.mxu0 %v129
  %150 = vmatprep.subr.bf16.mxu0 0
  %151 = vmatpush1.bf16.msra.mxu0 %v130
  %152 = vmatprep.subr.bf16.mxu0 0
  %153 = vmatpush1.bf16.msra.mxu0 %v131
  %154 = vmatprep.subr.bf16.mxu0 0
  %155 = vmatpush1.bf16.msra.mxu0 %v132
  %156 = vmatprep.subr.bf16.mxu0 0
  %157 = vmatpush1.bf16.msra.mxu0 %v133
  %158 = vmatprep.subr.bf16.mxu0 0
  %159 = vmatpush1.bf16.msra.mxu0 0
  %160 = vmatprep.subr.bf16.mxu0 0
  %161 = vmatpush1.bf16.msra.mxu0 0
  %162 = vmatprep.subr.bf16.mxu0 0
  %163 = vmatpush1.bf16.msra.mxu0 0
  %164 = vmatprep.subr.bf16.mxu0 0
  %165 = vmatpush1.bf16.msra.mxu0 0
  %166 = vmatprep.subr.bf16.mxu0 0
  %167 = vmatpush1.bf16.msra.mxu0 0
  %168 = vmatprep.subr.bf16.mxu0 0
  %169 = vmatpush1.bf16.msra.mxu0 0
  %170 = vmatprep.subr.bf16.mxu0 0
  %171 = vmatpush1.bf16.msra.mxu0 0
  %172 = vmatprep.subr.bf16.mxu0 0
  %173 = vmatpush1.bf16.msra.mxu0 0
  %174 = vmatprep.mubr.bf16.mxu0 0
  %175 = vmatmul.mubr.bf16.gmra.mrb[0].mxu0 %v78
  %v176 = vpop.f32.mrb[0].mxu0
  %v177 = vadd.f32 0.0, %v176
  %v178 = vpop.f32.mrb[0].mxu0
  %v179 = vpop.f32.mrb[0].mxu0
  %v180 = vadd.f32 0.0, %v179
  %v181 = vpop.f32.mrb[0].mxu0
  %182 = vmatprep.mubr.bf16.mxu0 0
  %183 = vmatmul.mubr.bf16.gmra.mrb[0].mxu0 %v79
  %v184 = vpop.f32.mrb[0].mxu0
  %v185 = vadd.f32 0.0, %v184
  %v186 = vpop.f32.mrb[0].mxu0
  %v187 = vpop.f32.mrb[0].mxu0
  %v188 = vadd.f32 0.0, %v187
  %v189 = vpop.f32.mrb[0].mxu0
  %190 = vmatprep.mubr.bf16.mxu0 0
  %191 = vmatmul.mubr.bf16.gmra.mrb[0].mxu0 %v80
  %v192 = vpop.f32.mrb[0].mxu0
  %v193 = vadd.f32 0.0, %v192
  %v194 = vpop.f32.mrb[0].mxu0
  %v195 = vpop.f32.mrb[0].mxu0
  %v196 = vadd.f32 0.0, %v195
  %v197 = vpop.f32.mrb[0].mxu0
  %198 = vmatprep.mubr.bf16.mxu0 0
  %199 = vmatmul.mubr.bf16.gmra.mrb[0].mxu0 %v81
  %v200 = vpop.f32.mrb[0].mxu0
  %v201 = vadd.f32 0.0, %v200
  %v202 = vpop.f32.mrb[0].mxu0
  %v203 = vpop.f32.mrb[0].mxu0
  %v204 = vadd.f32 0.0, %v203
  %v205 = vpop.f32.mrb[0].mxu0
  %206 = vmatprep.mubr.bf16.mxu0 0
  %207 = vmatmul.mubr.bf16.gmra.mrb[0].mxu0 %v82
  %v208 = vpop.f32.mrb[0].mxu0
  %v209 = vadd.f32 0.0, %v208
  %v210 = vpop.f32.mrb[0].mxu0
  %v211 = vpop.f32.mrb[0].mxu0
  %v212 = vadd.f32 0.0, %v211
  %v213 = vpop.f32.mrb[0].mxu0
  %214 = vmatprep.mubr.bf16.mxu0 0
  %215 = vmatmul.mubr.bf16.gmra.mrb[0].mxu0 %v83
  %v216 = vpop.f32.mrb[0].mxu0
  %v217 = vadd.f32 0.0, %v216
  %v218 = vpop.f32.mrb[0].mxu0
  %v219 = vpop.f32.mrb[0].mxu0
  %v220 = vadd.f32 0.0, %v219
  %v221 = vpop.f32.mrb[0].mxu0
  %222 = vmatprep.mubr.bf16.mxu0 0
  %223 = vmatmul.mubr.bf16.gmra.mrb[0].mxu0 %v84
  %v224 = vpop.f32.mrb[0].mxu0
  %v225 = vadd.f32 0.0, %v224
  %v226 = vpop.f32.mrb[0].mxu0
  %v227 = vpop.f32.mrb[0].mxu0
  %v228 = vadd.f32 0.0, %v227
  %v229 = vpop.f32.mrb[0].mxu0
  %230 = vmatprep.mubr.bf16.mxu0 0
  %231 = vmatmul.mubr.bf16.gmra.mrb[0].mxu0 %v85
  %v232 = vpop.f32.mrb[0].mxu0
  %v233 = vadd.f32 0.0, %v232
  %v234 = vpop.f32.mrb[0].mxu0
  %v235 = vpop.f32.mrb[0].mxu0
  %v236 = vadd.f32 0.0, %v235
  %v237 = vpop.f32.mrb[0].mxu0
  %238 = vdwg.mxu0
  %vm239 = vcmask 130048
  %240 = vst.msk [vmem:[%s2] sm:$0xff] %vm239, %v177
  %241 = vst.msk [vmem:[%s2 + $0x8] sm:$0xff] %vm239, %v180
  %242 = vst.msk [vmem:[%s2 + $0x10] sm:$0xff] %vm239, %v185
  %243 = vst.msk [vmem:[%s2 + $0x18] sm:$0xff] %vm239, %v188
  %244 = vst.msk [vmem:[%s2 + $0x20] sm:$0xff] %vm239, %v193
  %245 = vst.msk [vmem:[%s2 + $0x28] sm:$0xff] %vm239, %v196
  %246 = vst.msk [vmem:[%s2 + $0x30] sm:$0xff] %vm239, %v201
  %247 = vst.msk [vmem:[%s2 + $0x38] sm:$0xff] %vm239, %v204
  %248 = vst.msk [vmem:[%s2 + $0x40] sm:$0xff] %vm239, %v209
  %249 = vst.msk [vmem:[%s2 + $0x48] sm:$0xff] %vm239, %v212
  %250 = vst.msk [vmem:[%s2 + $0x50] sm:$0xff] %vm239, %v217
  %251 = vst.msk [vmem:[%s2 + $0x58] sm:$0xff] %vm239, %v220
  %252 = vst.msk [vmem:[%s2 + $0x60] sm:$0xff] %vm239, %v225
  %253 = vst.msk [vmem:[%s2 + $0x68] sm:$0xff] %vm239, %v228
  %254 = vst.msk [vmem:[%s2 + $0x70] sm:$0xff] %vm239, %v233
  %255 = vst.msk [vmem:[%s2 + $0x78] sm:$0xff] %vm239, %v236
  %v256 = vsel %vm239, %v177, 0.0
  %v257 = vsel %vm239, %v180, 0.0
  %v258 = vadd.f32 %v256, %v257
  %v259 = vsel %vm239, %v185, 0.0
  %v260 = vadd.f32 %v258, %v259
  %v261 = vsel %vm239, %v188, 0.0
  %v262 = vadd.f32 %v260, %v261
  %v263 = vsel %vm239, %v193, 0.0
  %v264 = vadd.f32 %v262, %v263
  %v265 = vsel %vm239, %v196, 0.0
  %v266 = vadd.f32 %v264, %v265
  %v267 = vsel %vm239, %v201, 0.0
  %v268 = vadd.f32 %v266, %v267
  %v269 = vsel %vm239, %v204, 0.0
  %v270 = vadd.f32 %v268, %v269
  %v271 = vsel %vm239, %v209, 0.0
  %v272 = vadd.f32 %v270, %v271
  %v273 = vsel %vm239, %v212, 0.0
  %v274 = vadd.f32 %v272, %v273
  %v275 = vsel %vm239, %v217, 0.0
  %v276 = vadd.f32 %v274, %v275
  %v277 = vsel %vm239, %v220, 0.0
  %v278 = vadd.f32 %v276, %v277
  %v279 = vsel %vm239, %v225, 0.0
  %v280 = vadd.f32 %v278, %v279
  %v281 = vsel %vm239, %v228, 0.0
  %v282 = vadd.f32 %v280, %v281
  %v283 = vsel %vm239, %v233, 0.0
  %v284 = vadd.f32 %v282, %v283
  %v285 = vsel %vm239, %v236, 0.0
  %v286 = vadd.f32 %v284, %v285
  %v287 = vrot.slane %v286, 4
  %v288 = vadd.f32 %v286, %v287
  %v289 = vrot.slane %v288, 2
  %v290 = vadd.f32 %v288, %v289
  %v291 = vrot.slane %v290, 1
  %v292 = vadd.f32 %v290, %v291
  %v293 = vmul.f32 %v177, %v177
  %v294 = vmul.f32 %v180, %v180
  %v295 = vmul.f32 %v185, %v185
  %v296 = vmul.f32 %v188, %v188
  %v297 = vmul.f32 %v193, %v193
  %v298 = vmul.f32 %v196, %v196
  %v299 = vmul.f32 %v201, %v201
  %v300 = vmul.f32 %v204, %v204
  %v301 = vmul.f32 %v209, %v209
  %v302 = vmul.f32 %v212, %v212
  %v303 = vmul.f32 %v217, %v217
  %v304 = vmul.f32 %v220, %v220
  %v305 = vmul.f32 %v225, %v225
  %v306 = vmul.f32 %v228, %v228
  %v307 = vmul.f32 %v233, %v233
  %v308 = vmul.f32 %v236, %v236
  %v309 = vsel %vm239, %v293, 0.0
  %v310 = vsel %vm239, %v294, 0.0
  %v311 = vadd.f32 %v309, %v310
  %v312 = vsel %vm239, %v295, 0.0
  %v313 = vadd.f32 %v311, %v312
  %v314 = vsel %vm239, %v296, 0.0
  %v315 = vadd.f32 %v313, %v314
  %v316 = vsel %vm239, %v297, 0.0
  %v317 = vadd.f32 %v315, %v316
  %v318 = vsel %vm239, %v298, 0.0
  %v319 = vadd.f32 %v317, %v318
  %v320 = vsel %vm239, %v299, 0.0
  %v321 = vadd.f32 %v319, %v320
  %v322 = vsel %vm239, %v300, 0.0
  %v323 = vadd.f32 %v321, %v322
  %v324 = vsel %vm239, %v301, 0.0
  %v325 = vadd.f32 %v323, %v324
  %v326 = vsel %vm239, %v302, 0.0
  %v327 = vadd.f32 %v325, %v326
  %v328 = vsel %vm239, %v303, 0.0
  %v329 = vadd.f32 %v327, %v328
  %v330 = vsel %vm239, %v304, 0.0
  %v331 = vadd.f32 %v329, %v330
  %v332 = vsel %vm239, %v305, 0.0
  %v333 = vadd.f32 %v331, %v332
  %v334 = vsel %vm239, %v306, 0.0
  %v335 = vadd.f32 %v333, %v334
  %v336 = vsel %vm239, %v307, 0.0
  %v337 = vadd.f32 %v335, %v336
  %v338 = vsel %vm239, %v308, 0.0
  %v339 = vadd.f32 %v337, %v338
  %v340 = vrot.slane %v339, 4
  %v341 = vadd.f32 %v339, %v340
  %v342 = vrot.slane %v341, 2
  %v343 = vadd.f32 %v341, %v342
  %v344 = vrot.slane %v343, 1
  %v345 = vadd.f32 %v343, %v344
  %vm346 = vcmask 1040384
  %v347 = vsel %vm346, %v292, %v345
  %vm348 = vcmask 1041408
  %v349 = vsel %vm348, %v347, 0.0
  %350 = vst.msk [vmem:[%s3] sm:$0xff] %vm239, %v349
  // Predicated region
  $region10: #{discriminator_forward.7} parent=0 // pred_check
    _
  $region11: #{discriminator_forward.7} parent=0 // pred_check_branch
    %352 = sbr.rel (0) target = $region13
  $region12: #{discriminator_forward.7} parent=0 // pred_region
    _
  $region13: #{discriminator_forward.7} parent=0 // pred_fallthru
    _
  // Predicated region
  $region14: #{discriminator_forward.7} parent=0 // pred_check
    _
  $region15: #{discriminator_forward.7} parent=0 // pred_check_branch
    %354 = sbr.rel (0) target = $region17
  $region16: #{discriminator_forward.7} parent=0 // pred_region
    _
  $region17: #{discriminator_forward.7} parent=0 // pred_fallthru
    _
  // Predicated region
  $region18: #{discriminator_forward.7} parent=0 // pred_check
    _
  $region19: #{discriminator_forward.7} parent=0 // pred_check_branch
    %356 = sbr.rel (0) target = $region21
  $region20: #{discriminator_forward.7} parent=0 // pred_region
    _
  $region21: #{discriminator_forward.7} parent=0 // pred_fallthru
    _
  // Predicated region
  $region22: #{discriminator_forward.7} parent=0 // pred_check
    _
  $region23: #{discriminator_forward.7} parent=0 // pred_check_branch
    %358 = sbr.rel (0) target = $region25
  $region24: #{discriminator_forward.7} parent=0 // pred_region
    _
  $region25: #{discriminator_forward.7} parent=0 // pred_fallthru
    _

// kernel: discriminator_forward.8
$region0: #{discriminator_forward.8}
  #allocation0 [shape = 'u32[]', space=smem, size = 0x4, offset = 0x4, fixed_abs, tag = 'smem constant byte address 0x4 - core index']
  #allocation1 [shape = 'u32[144,128]{1,0:T(1,128)}', space=vmem, size = 0x12000, scoped, tag = 'internal scratch']
  %s0 = inlined_call_operand.vmem [shape: f32[128,16], index: 0, kind: input, shape index: {}]
  %s1 = inlined_call_operand.vmem [shape: f32[1,16], index: 1, kind: input, shape index: {}]
  %s2 = inlined_call_operand.vmem [shape: f32[1,16], index: 2, kind: input, shape index: {}]
  %s3 = inlined_call_operand.vmem [shape: bf16[128,16], index: 3, kind: output, shape index: {}]
  %s4 = sld [smem:[#allocation0]]
  $region22: #{discriminator_forward.8} parent=0
    _
  %s6 = ssub.s32 1, %s4
  %s7 = scalar_select 0, %s6, %s4
  // Predicated region
  $region2: #{discriminator_forward.8} parent=0 // pred_check
    _
  $region3: #{discriminator_forward.8} parent=0 // pred_check_branch
    %9 = sbr.rel (0) target = $region5
  $region4: #{discriminator_forward.8} parent=0 // pred_region
    _
  $region5: #{discriminator_forward.8} parent=0 // pred_fallthru
    _
  // Predicated region
  $region6: #{discriminator_forward.8} parent=0 // pred_check
    _
  $region7: #{discriminator_forward.8} parent=0 // pred_check_branch
    %11 = sbr.rel (0) target = $region9
  $region8: #{discriminator_forward.8} parent=0 // pred_region
    _
  $region9: #{discriminator_forward.8} parent=0 // pred_fallthru
    _
  // Predicated region
  $region10: #{discriminator_forward.8} parent=0 // pred_check
    _
  $region11: #{discriminator_forward.8} parent=0 // pred_check_branch
    %13 = sbr.rel (0) target = $region13
  $region12: #{discriminator_forward.8} parent=0 // pred_region
    _
  $region13: #{discriminator_forward.8} parent=0 // pred_fallthru
    _
  %v14 = vld [vmem:[%s0] sm:$0xff]
  %v15 = vld [vmem:[%s0 + $0x8] sm:$0xff]
  %v16 = vld [vmem:[%s0 + $0x10] sm:$0xff]
  %v17 = vld [vmem:[%s0 + $0x18] sm:$0xff]
  %v18 = vld [vmem:[%s0 + $0x20] sm:$0xff]
  %v19 = vld [vmem:[%s0 + $0x28] sm:$0xff]
  %v20 = vld [vmem:[%s0 + $0x30] sm:$0xff]
  %v21 = vld [vmem:[%s0 + $0x38] sm:$0xff]
  %v22 = vld [vmem:[%s0 + $0x40] sm:$0xff]
  %v23 = vld [vmem:[%s0 + $0x48] sm:$0xff]
  %v24 = vld [vmem:[%s0 + $0x50] sm:$0xff]
  %v25 = vld [vmem:[%s0 + $0x58] sm:$0xff]
  %v26 = vld [vmem:[%s0 + $0x60] sm:$0xff]
  %v27 = vld [vmem:[%s0 + $0x68] sm:$0xff]
  %v28 = vld [vmem:[%s0 + $0x70] sm:$0xff]
  %v29 = vld [vmem:[%s0 + $0x78] sm:$0xff]
  %v30 = vld [vmem:[%s1] sm:$0x1]
  %v32 = vlaneseq
  %v33 = vshrl.u32 %v32, 7
  %v34 = vsub.s32 0, %v33
  %v35 = vrot.slane %v30, %v34
  %v37 = vmul.f32 %v14, %v35
  %v38 = vmul.f32 %v15, %v35
  %v39 = vmul.f32 %v16, %v35
  %v40 = vmul.f32 %v17, %v35
  %v41 = vmul.f32 %v18, %v35
  %v42 = vmul.f32 %v19, %v35
  %v43 = vmul.f32 %v20, %v35
  %v44 = vmul.f32 %v21, %v35
  %v45 = vmul.f32 %v22, %v35
  %v46 = vmul.f32 %v23, %v35
  %v47 = vmul.f32 %v24, %v35
  %v48 = vmul.f32 %v25, %v35
  %v49 = vmul.f32 %v26, %v35
  %v50 = vmul.f32 %v27, %v35
  %v51 = vmul.f32 %v28, %v35
  %v52 = vmul.f32 %v29, %v35
  %v53 = vld [vmem:[%s2] sm:$0x1]
  %v55 = vlaneseq
  %v56 = vshrl.u32 %v55, 7
  %v57 = vsub.s32 0, %v56
  %v58 = vrot.slane %v53, %v57
  %v60 = vadd.f32 %v37, %v58
  %v61 = vadd.f32 %v38, %v58
  %v62 = vadd.f32 %v39, %v58
  %v63 = vadd.f32 %v40, %v58
  %v64 = vadd.f32 %v41, %v58
  %v65 = vadd.f32 %v42, %v58
  %v66 = vadd.f32 %v43, %v58
  %v67 = vadd.f32 %v44, %v58
  %v68 = vadd.f32 %v45, %v58
  %v69 = vadd.f32 %v46, %v58
  %v70 = vadd.f32 %v47, %v58
  %v71 = vadd.f32 %v48, %v58
  %v72 = vadd.f32 %v49, %v58
  %v73 = vadd.f32 %v50, %v58
  %v74 = vadd.f32 %v51, %v58
  %v75 = vadd.f32 %v52, %v58
  %vm76 = vcmp.gt.f32.partialorder %v60, 0.0
  %vm77 = vcmp.gt.f32.partialorder %v61, 0.0
  %vm78 = vcmp.gt.f32.partialorder %v62, 0.0
  %vm79 = vcmp.gt.f32.partialorder %v63, 0.0
  %vm80 = vcmp.gt.f32.partialorder %v64, 0.0
  %vm81 = vcmp.gt.f32.partialorder %v65, 0.0
  %vm82 = vcmp.gt.f32.partialorder %v66, 0.0
  %vm83 = vcmp.gt.f32.partialorder %v67, 0.0
  %vm84 = vcmp.gt.f32.partialorder %v68, 0.0
  %vm85 = vcmp.gt.f32.partialorder %v69, 0.0
  %vm86 = vcmp.gt.f32.partialorder %v70, 0.0
  %vm87 = vcmp.gt.f32.partialorder %v71, 0.0
  %vm88 = vcmp.gt.f32.partialorder %v72, 0.0
  %vm89 = vcmp.gt.f32.partialorder %v73, 0.0
  %vm90 = vcmp.gt.f32.partialorder %v74, 0.0
  %vm91 = vcmp.gt.f32.partialorder %v75, 0.0
  %v92 = vmul.f32 %v60, 0.2
  %v93 = vmul.f32 %v61, 0.2
  %v94 = vmul.f32 %v62, 0.2
  %v95 = vmul.f32 %v63, 0.2
  %v96 = vmul.f32 %v64, 0.2
  %v97 = vmul.f32 %v65, 0.2
  %v98 = vmul.f32 %v66, 0.2
  %v99 = vmul.f32 %v67, 0.2
  %v100 = vmul.f32 %v68, 0.2
  %v101 = vmul.f32 %v69, 0.2
  %v102 = vmul.f32 %v70, 0.2
  %v103 = vmul.f32 %v71, 0.2
  %v104 = vmul.f32 %v72, 0.2
  %v105 = vmul.f32 %v73, 0.2
  %v106 = vmul.f32 %v74, 0.2
  %v107 = vmul.f32 %v75, 0.2
  %v108 = vsel %vm76, %v60, %v92
  %v109 = vsel %vm77, %v61, %v93
  %v110 = vsel %vm78, %v62, %v94
  %v111 = vsel %vm79, %v63, %v95
  %v112 = vsel %vm80, %v64, %v96
  %v113 = vsel %vm81, %v65, %v97
  %v114 = vsel %vm82, %v66, %v98
  %v115 = vsel %vm83, %v67, %v99
  %v116 = vsel %vm84, %v68, %v100
  %v117 = vsel %vm85, %v69, %v101
  %v118 = vsel %vm86, %v70, %v102
  %v119 = vsel %vm87, %v71, %v103
  %v120 = vsel %vm88, %v72, %v104
  %v121 = vsel %vm89, %v73, %v105
  %v122 = vsel %vm90, %v74, %v106
  %v123 = vsel %vm91, %v75, %v107
  %v124 = vpack.c.bf16 %v109, %v108
  %v125 = vpack.c.bf16 %v111, %v110
  %v126 = vpack.c.bf16 %v113, %v112
  %v127 = vpack.c.bf16 %v115, %v114
  %v128 = vpack.c.bf16 %v117, %v116
  %v129 = vpack.c.bf16 %v119, %v118
  %v130 = vpack.c.bf16 %v121, %v120
  %v131 = vpack.c.bf16 %v123, %v122
  %v140 = vunpack.c.l.b16 %v124
  %v141 = vunpack.c.h.b16 %v124
  %v142 = vunpack.c.l.b16 %v125
  %v143 = vunpack.c.h.b16 %v125
  %v144 = vunpack.c.l.b16 %v126
  %v145 = vunpack.c.h.b16 %v126
  %v146 = vunpack.c.l.b16 %v127
  %v147 = vunpack.c.h.b16 %v127
  %v148 = vunpack.c.l.b16 %v128
  %v149 = vunpack.c.h.b16 %v128
  %v150 = vunpack.c.l.b16 %v129
  %v151 = vunpack.c.h.b16 %v129
  %v152 = vunpack.c.l.b16 %v130
  %v153 = vunpack.c.h.b16 %v130
  %v154 = vunpack.c.l.b16 %v131
  %v155 = vunpack.c.h.b16 %v131
  %v156 = vpack.c.b16 %v140, %v140
  %v157 = vpack.c.b16 %v141, %v141
  %v158 = vpack.c.b16 %v142, %v142
  %v159 = vpack.c.b16 %v143, %v143
  %v160 = vpack.c.b16 %v144, %v144
  %v161 = vpack.c.b16 %v145, %v145
  %v162 = vpack.c.b16 %v146, %v146
  %v163 = vpack.c.b16 %v147, %v147
  %v164 = vpack.c.b16 %v148, %v148
  %v165 = vpack.c.b16 %v149, %v149
  %v166 = vpack.c.b16 %v150, %v150
  %v167 = vpack.c.b16 %v151, %v151
  %v168 = vpack.c.b16 %v152, %v152
  %v169 = vpack.c.b16 %v153, %v153
  %v170 = vpack.c.b16 %v154, %v154
  %v171 = vpack.c.b16 %v155, %v155
  %vm188 = vcmask 125952
  %189 = vst.msk [vmem:[%s3] sm:$0xf] %vm188, %v156
  %190 = vst.msk [vmem:[%s3 + $0x4] sm:$0xf] %vm188, %v157
  %191 = vst.msk [vmem:[%s3 + $0x8] sm:$0xf] %vm188, %v158
  %192 = vst.msk [vmem:[%s3 + $0xc] sm:$0xf] %vm188, %v159
  %193 = vst.msk [vmem:[%s3 + $0x10] sm:$0xf] %vm188, %v160
  %194 = vst.msk [vmem:[%s3 + $0x14] sm:$0xf] %vm188, %v161
  %195 = vst.msk [vmem:[%s3 + $0x18] sm:$0xf] %vm188, %v162
  %196 = vst.msk [vmem:[%s3 + $0x1c] sm:$0xf] %vm188, %v163
  %197 = vst.msk [vmem:[%s3 + $0x20] sm:$0xf] %vm188, %v164
  %198 = vst.msk [vmem:[%s3 + $0x24] sm:$0xf] %vm188, %v165
  %199 = vst.msk [vmem:[%s3 + $0x28] sm:$0xf] %vm188, %v166
  %200 = vst.msk [vmem:[%s3 + $0x2c] sm:$0xf] %vm188, %v167
  %201 = vst.msk [vmem:[%s3 + $0x30] sm:$0xf] %vm188, %v168
  %202 = vst.msk [vmem:[%s3 + $0x34] sm:$0xf] %vm188, %v169
  %203 = vst.msk [vmem:[%s3 + $0x38] sm:$0xf] %vm188, %v170
  %204 = vst.msk [vmem:[%s3 + $0x3c] sm:$0xf] %vm188, %v171
  // Predicated region
  $region14: #{discriminator_forward.8} parent=0 // pred_check
    _
  $region15: #{discriminator_forward.8} parent=0 // pred_check_branch
    %206 = sbr.rel (0) target = $region17
  $region16: #{discriminator_forward.8} parent=0 // pred_region
    _
  $region17: #{discriminator_forward.8} parent=0 // pred_fallthru
    _
  // Predicated region
  $region18: #{discriminator_forward.8} parent=0 // pred_check
    _
  $region19: #{discriminator_forward.8} parent=0 // pred_check_branch
    %208 = sbr.rel (0) target = $region21
  $region20: #{discriminator_forward.8} parent=0 // pred_region
    _
  $region21: #{discriminator_forward.8} parent=0 // pred_fallthru
    _

// kernel: discriminator_forward.9
$region0: #{discriminator_forward.9}
  #allocation0 [shape = 'u32[]', space=smem, size = 0x4, offset = 0x4, fixed_abs, tag = 'smem constant byte address 0x4 - core index']
  #allocation1 [shape = 'u32[144,128]{1,0:T(1,128)}', space=vmem, size = 0x12000, scoped, tag = 'internal scratch']
  %s0 = inlined_call_operand.vmem [shape: bf16[32,256], index: 0, kind: input, shape index: {}]
  %s1 = inlined_call_operand.vmem [shape: bf16[256,32], index: 1, kind: input, shape index: {}]
  %s2 = inlined_call_operand.vmem [shape: f32[32,32], index: 2, kind: output, shape index: {0}]
  %s3 = inlined_call_operand.vmem [shape: f32[1,8,32], index: 3, kind: output, shape index: {1}]
  %4 = xla_tuple %s2, %s3
  %s5 = sld [smem:[#allocation0]]
  $region26: #{discriminator_forward.9} parent=0
    _
  %s7 = ssub.s32 1, %s5
  %s8 = scalar_select 0, %s7, %s5
  // Predicated region
  $region2: #{discriminator_forward.9} parent=0 // pred_check
    _
  $region3: #{discriminator_forward.9} parent=0 // pred_check_branch
    %10 = sbr.rel (0) target = $region5
  $region4: #{discriminator_forward.9} parent=0 // pred_region
    _
  $region5: #{discriminator_forward.9} parent=0 // pred_fallthru
    _
  // Predicated region
  $region6: #{discriminator_forward.9} parent=0 // pred_check
    _
  $region7: #{discriminator_forward.9} parent=0 // pred_check_branch
    %12 = sbr.rel (0) target = $region9
  $region8: #{discriminator_forward.9} parent=0 // pred_region
    _
  $region9: #{discriminator_forward.9} parent=0 // pred_fallthru
    _
  %v14 = vld [vmem:[%s0] sm:$0xff]
  %v15 = vld [vmem:[%s0 + $0x8] sm:$0xff]
  %v16 = vld [vmem:[%s0 + $0x10] sm:$0xff]
  %v17 = vld [vmem:[%s0 + $0x18] sm:$0xff]
  %v18 = vld [vmem:[%s1] sm:$0xf]
  %v19 = vld [vmem:[%s1 + $0x4] sm:$0xf]
  %v20 = vld [vmem:[%s1 + $0x8] sm:$0xf]
  %v21 = vld [vmem:[%s1 + $0xc] sm:$0xf]
  %v22 = vld [vmem:[%s1 + $0x10] sm:$0xf]
  %v23 = vld [vmem:[%s1 + $0x14] sm:$0xf]
  %v24 = vld [vmem:[%s1 + $0x18] sm:$0xf]
  %v25 = vld [vmem:[%s1 + $0x1c] sm:$0xf]
  %v26 = vld [vmem:[%s1 + $0x20] sm:$0xf]
  %v27 = vld [vmem:[%s1 + $0x24] sm:$0xf]
  %v28 = vld [vmem:[%s1 + $0x28] sm:$0xf]
  %v29 = vld [vmem:[%s1 + $0x2c] sm:$0xf]
  %v30 = vld [vmem:[%s1 + $0x30] sm:$0xf]
  %v31 = vld [vmem:[%s1 + $0x34] sm:$0xf]
  %v32 = vld [vmem:[%s1 + $0x38] sm:$0xf]
  %v33 = vld [vmem:[%s1 + $0x3c] sm:$0xf]
  %v34 = vld [vmem:[%s1 + $0x40] sm:$0xf]
  %v35 = vld [vmem:[%s1 + $0x44] sm:$0xf]
  %v36 = vld [vmem:[%s1 + $0x48] sm:$0xf]
  %v37 = vld [vmem:[%s1 + $0x4c] sm:$0xf]
  %v38 = vld [vmem:[%s1 + $0x50] sm:$0xf]
  %v39 = vld [vmem:[%s1 + $0x54] sm:$0xf]
  %v40 = vld [vmem:[%s1 + $0x58] sm:$0xf]
  %v41 = vld [vmem:[%s1 + $0x5c] sm:$0xf]
  %v42 = vld [vmem:[%s1 + $0x60] sm:$0xf]
  %v43 = vld [vmem:[%s1 + $0x64] sm:$0xf]
  %v44 = vld [vmem:[%s1 + $0x68] sm:$0xf]
  %v45 = vld [vmem:[%s1 + $0x6c] sm:$0xf]
  %v46 = vld [vmem:[%s1 + $0x70] sm:$0xf]
  %v47 = vld [vmem:[%s1 + $0x74] sm:$0xf]
  %v48 = vld [vmem:[%s1 + $0x78] sm:$0xf]
  %v49 = vld [vmem:[%s1 + $0x7c] sm:$0xf]
  %v54 = vunpack.c.l.b16 %v14
  %v55 = vunpack.c.h.b16 %v14
  %v56 = vunpack.c.l.b16 %v15
  %v57 = vunpack.c.h.b16 %v15
  %v58 = vunpack.c.l.b16 %v16
  %v59 = vunpack.c.h.b16 %v16
  %v60 = vunpack.c.l.b16 %v17
  %v61 = vunpack.c.h.b16 %v17
  %v62 = vpack.c.b16 %v56, %v54
  %v63 = vpack.c.b16 %v57, %v55
  %v64 = vpack.c.b16 %v60, %v58
  %v65 = vpack.c.b16 %v61, %v59
  %v102 = vunpack.c.l.b16 %v18
  %v103 = vunpack.c.l.b16 %v19
  %v104 = vunpack.c.l.b16 %v20
  %v105 = vunpack.c.l.b16 %v21
  %v106 = vunpack.c.l.b16 %v22
  %v107 = vunpack.c.l.b16 %v23
  %v108 = vunpack.c.l.b16 %v24
  %v109 = vunpack.c.l.b16 %v25
  %v110 = vunpack.c.l.b16 %v26
  %v111 = vunpack.c.l.b16 %v27
  %v112 = vunpack.c.l.b16 %v28
  %v113 = vunpack.c.l.b16 %v29
  %v114 = vunpack.c.l.b16 %v30
  %v115 = vunpack.c.l.b16 %v31
  %v116 = vunpack.c.l.b16 %v32
  %v117 = vunpack.c.l.b16 %v33
  %v118 = vunpack.c.l.b16 %v34
  %v119 = vunpack.c.l.b16 %v35
  %v120 = vunpack.c.l.b16 %v36
  %v121 = vunpack.c.l.b16 %v37
  %v122 = vunpack.c.l.b16 %v38
  %v123 = vunpack.c.l.b16 %v39
  %v124 = vunpack.c.l.b16 %v40
  %v125 = vunpack.c.l.b16 %v41
  %v126 = vunpack.c.l.b16 %v42
  %v127 = vunpack.c.l.b16 %v43
  %v128 = vunpack.c.l.b16 %v44
  %v129 = vunpack.c.l.b16 %v45
  %v130 = vunpack.c.l.b16 %v46
  %v131 = vunpack.c.l.b16 %v47
  %v132 = vunpack.c.l.b16 %v48
  %v133 = vunpack.c.l.b16 %v49
  %v134 = vpack.c.b16 %v103, %v102
  %v135 = vpack.c.b16 %v105, %v104
  %v136 = vpack.c.b16 %v107, %v106
  %v137 = vpack.c.b16 %v109, %v108
  %v138 = vpack.c.b16 %v111, %v110
  %v139 = vpack.c.b16 %v113, %v112
  %v140 = vpack.c.b16 %v115, %v114
  %v141 = vpack.c.b16 %v117, %v116
  %v142 = vpack.c.b16 %v119, %v118
  %v143 = vpack.c.b16 %v121, %v120
  %v144 = vpack.c.b16 %v123, %v122
  %v145 = vpack.c.b16 %v125, %v124
  %v146 = vpack.c.b16 %v127, %v126
  %v147 = vpack.c.b16 %v129, %v128
  %v148 = vpack.c.b16 %v131, %v130
  %v149 = vpack.c.b16 %v133, %v132
  %166 = vmatprep.subr.bf16.mxu0 0
  %167 = vmatpush1.bf16.msra.mxu0 %v134
  %168 = vmatprep.subr.bf16.mxu0 0
  %169 = vmatpush1.bf16.msra.mxu0 %v135
  %170 = vmatprep.subr.bf16.mxu0 0
  %171 = vmatpush1.bf16.msra.mxu0 %v136
  %172 = vmatprep.subr.bf16.mxu0 0
  %173 = vmatpush1.bf16.msra.mxu0 %v137
  %174 = vmatprep.subr.bf16.mxu0 0
  %175 = vmatpush1.bf16.msra.mxu0 %v138
  %176 = vmatprep.subr.bf16.mxu0 0
  %177 = vmatpush1.bf16.msra.mxu0 %v139
  %178 = vmatprep.subr.bf16.mxu0 0
  %179 = vmatpush1.bf16.msra.mxu0 %v140
  %180 = vmatprep.subr.bf16.mxu0 0
  %181 = vmatpush1.bf16.msra.mxu0 %v141
  %182 = vmatprep.subr.bf16.mxu0 0
  %183 = vmatpush1.bf16.msra.mxu0 %v142
  %184 = vmatprep.subr.bf16.mxu0 0
  %185 = vmatpush1.bf16.msra.mxu0 %v143
  %186 = vmatprep.subr.bf16.mxu0 0
  %187 = vmatpush1.bf16.msra.mxu0 %v144
  %188 = vmatprep.subr.bf16.mxu0 0
  %189 = vmatpush1.bf16.msra.mxu0 %v145
  %190 = vmatprep.subr.bf16.mxu0 0
  %191 = vmatpush1.bf16.msra.mxu0 %v146
  %192 = vmatprep.subr.bf16.mxu0 0
  %193 = vmatpush1.bf16.msra.mxu0 %v147
  %194 = vmatprep.subr.bf16.mxu0 0
  %195 = vmatpush1.bf16.msra.mxu0 %v148
  %196 = vmatprep.subr.bf16.mxu0 0
  %197 = vmatpush1.bf16.msra.mxu0 %v149
  %198 = vmatprep.mubr.bf16.mxu0 %v63
  %199 = vmatmul.mubr.bf16.gmra.mrb[0].mxu0 %v62
  %v200 = vpop.f32.mrb[0].mxu0
  %v201 = vadd.f32 0.0, %v200
  %v202 = vpop.f32.mrb[0].mxu0
  %v203 = vpop.f32.mrb[0].mxu0
  %v204 = vadd.f32 0.0, %v203
  %v205 = vpop.f32.mrb[0].mxu0
  %206 = vmatprep.mubr.bf16.mxu0 %v65
  %207 = vmatmul.mubr.bf16.gmra.mrb[0].mxu0 %v64
  %v208 = vpop.f32.mrb[0].mxu0
  %v209 = vadd.f32 0.0, %v208
  %v210 = vpop.f32.mrb[0].mxu0
  %v211 = vpop.f32.mrb[0].mxu0
  %v212 = vadd.f32 0.0, %v211
  %v213 = vpop.f32.mrb[0].mxu0
  %214 = vdwg.mxu0
  %vm215 = vcmask 261120
  %216 = vst.msk [vmem:[%s2] sm:$0xff] %vm215, %v201
  %217 = vst.msk [vmem:[%s2 + $0x8] sm:$0xff] %vm215, %v204
  %218 = vst.msk [vmem:[%s2 + $0x10] sm:$0xff] %vm215, %v209
  %219 = vst.msk [vmem:[%s2 + $0x18] sm:$0xff] %vm215, %v212
  %v220 = vsel %vm215, %v201, 0.0
  %v221 = vsel %vm215, %v204, 0.0
  %v222 = vadd.f32 %v220, %v221
  %v223 = vsel %vm215, %v209, 0.0
  %v224 = vadd.f32 %v222, %v223
  %v225 = vsel %vm215, %v212, 0.0
  %v226 = vadd.f32 %v224, %v225
  %v227 = vrot.slane %v226, 4
  %v228 = vadd.f32 %v226, %v227
  %v229 = vrot.slane %v228, 2
  %v230 = vadd.f32 %v228, %v229
  %v231 = vrot.slane %v230, 1
  %v232 = vadd.f32 %v230, %v231
  %v233 = vmul.f32 %v201, %v201
  %v234 = vmul.f32 %v204, %v204
  %v235 = vmul.f32 %v209, %v209
  %v236 = vmul.f32 %v212, %v212
  %v237 = vsel %vm215, %v233, 0.0
  %v238 = vsel %vm215, %v234, 0.0
  %v239 = vadd.f32 %v237, %v238
  %v240 = vsel %vm215, %v235, 0.0
  %v241 = vadd.f32 %v239, %v240
  %v242 = vsel %vm215, %v236, 0.0
  %v243 = vadd.f32 %v241, %v242
  %v244 = vrot.slane %v243, 4
  %v245 = vadd.f32 %v243, %v244
  %v246 = vrot.slane %v245, 2
  %v247 = vadd.f32 %v245, %v246
  %v248 = vrot.slane %v247, 1
  %v249 = vadd.f32 %v247, %v248
  %vm250 = vcmask 1040384
  %v251 = vsel %vm250, %v232, %v249
  %vm252 = vcmask 1041408
  %v253 = vsel %vm252, %v251, 0.0
  %254 = vst.msk [vmem:[%s3] sm:$0xff] %vm215, %v253
  // Predicated region
  $region10: #{discriminator_forward.9} parent=0 // pred_check
    _
  $region11: #{discriminator_forward.9} parent=0 // pred_check_branch
    %256 = sbr.rel (0) target = $region13
  $region12: #{discriminator_forward.9} parent=0 // pred_region
    _
  $region13: #{discriminator_forward.9} parent=0 // pred_fallthru
    _
  // Predicated region
  $region14: #{discriminator_forward.9} parent=0 // pred_check
    _
  $region15: #{discriminator_forward.9} parent=0 // pred_check_branch
    %258 = sbr.rel (0) target = $region17
  $region16: #{discriminator_forward.9} parent=0 // pred_region
    _
  $region17: #{discriminator_forward.9} parent=0 // pred_fallthru
    _
  // Predicated region
  $region18: #{discriminator_forward.9} parent=0 // pred_check
    _
  $region19: #{discriminator_forward.9} parent=0 // pred_check_branch
    %260 = sbr.rel (0) target = $region21
  $region20: #{discriminator_forward.9} parent=0 // pred_region
    _
  $region21: #{discriminator_forward.9} parent=0 // pred_fallthru
    _
  // Predicated region
  $region22: #{discriminator_forward.9} parent=0 // pred_check
    _
  $region23: #{discriminator_forward.9} parent=0 // pred_check_branch
    %262 = sbr.rel (0) target = $region25
  $region24: #{discriminator_forward.9} parent=0 // pred_region
    _
  $region25: #{discriminator_forward.9} parent=0 // pred_fallthru
    _

// kernel: discriminator_forward.10
$region0: #{discriminator_forward.10}
  #allocation0 [shape = 'u32[]', space=smem, size = 0x4, offset = 0x4, fixed_abs, tag = 'smem constant byte address 0x4 - core index']
  #allocation1 [shape = 'u32[144,128]{1,0:T(1,128)}', space=vmem, size = 0x12000, scoped, tag = 'internal scratch']
  %s0 = inlined_call_operand.vmem [shape: f32[32,32], index: 0, kind: input, shape index: {}]
  %s1 = inlined_call_operand.vmem [shape: f32[1,32], index: 1, kind: input, shape index: {}]
  %s2 = inlined_call_operand.vmem [shape: f32[1,32], index: 2, kind: input, shape index: {}]
  %s3 = inlined_call_operand.vmem [shape: bf16[32,32], index: 3, kind: output, shape index: {}]
  %s4 = sld [smem:[#allocation0]]
  $region22: #{discriminator_forward.10} parent=0
    _
  %s6 = ssub.s32 1, %s4
  %s7 = scalar_select 0, %s6, %s4
  // Predicated region
  $region2: #{discriminator_forward.10} parent=0 // pred_check
    _
  $region3: #{discriminator_forward.10} parent=0 // pred_check_branch
    %9 = sbr.rel (0) target = $region5
  $region4: #{discriminator_forward.10} parent=0 // pred_region
    _
  $region5: #{discriminator_forward.10} parent=0 // pred_fallthru
    _
  // Predicated region
  $region6: #{discriminator_forward.10} parent=0 // pred_check
    _
  $region7: #{discriminator_forward.10} parent=0 // pred_check_branch
    %11 = sbr.rel (0) target = $region9
  $region8: #{discriminator_forward.10} parent=0 // pred_region
    _
  $region9: #{discriminator_forward.10} parent=0 // pred_fallthru
    _
  // Predicated region
  $region10: #{discriminator_forward.10} parent=0 // pred_check
    _
  $region11: #{discriminator_forward.10} parent=0 // pred_check_branch
    %13 = sbr.rel (0) target = $region13
  $region12: #{discriminator_forward.10} parent=0 // pred_region
    _
  $region13: #{discriminator_forward.10} parent=0 // pred_fallthru
    _
  %v14 = vld [vmem:[%s0] sm:$0xff]
  %v15 = vld [vmem:[%s0 + $0x8] sm:$0xff]
  %v16 = vld [vmem:[%s0 + $0x10] sm:$0xff]
  %v17 = vld [vmem:[%s0 + $0x18] sm:$0xff]
  %v18 = vld [vmem:[%s1] sm:$0x1]
  %v20 = vlaneseq
  %v21 = vshrl.u32 %v20, 7
  %v22 = vsub.s32 0, %v21
  %v23 = vrot.slane %v18, %v22
  %v25 = vmul.f32 %v14, %v23
  %v26 = vmul.f32 %v15, %v23
  %v27 = vmul.f32 %v16, %v23
  %v28 = vmul.f32 %v17, %v23
  %v29 = vld [vmem:[%s2] sm:$0x1]
  %v31 = vlaneseq
  %v32 = vshrl.u32 %v31, 7
  %v33 = vsub.s32 0, %v32
  %v34 = vrot.slane %v29, %v33
  %v36 = vadd.f32 %v25, %v34
  %v37 = vadd.f32 %v26, %v34
  %v38 = vadd.f32 %v27, %v34
  %v39 = vadd.f32 %v28, %v34
  %vm40 = vcmp.gt.f32.partialorder %v36, 0.0
  %vm41 = vcmp.gt.f32.partialorder %v37, 0.0
  %vm42 = vcmp.gt.f32.partialorder %v38, 0.0
  %vm43 = vcmp.gt.f32.partialorder %v39, 0.0
  %v44 = vmul.f32 %v36, 0.2
  %v45 = vmul.f32 %v37, 0.2
  %v46 = vmul.f32 %v38, 0.2
  %v47 = vmul.f32 %v39, 0.2
  %v48 = vsel %vm40, %v36, %v44
  %v49 = vsel %vm41, %v37, %v45
  %v50 = vsel %vm42, %v38, %v46
  %v51 = vsel %vm43, %v39, %v47
  %v52 = vpack.c.bf16 %v49, %v48
  %v53 = vpack.c.bf16 %v51, %v50
  %v56 = vunpack.c.l.b16 %v52
  %v57 = vunpack.c.h.b16 %v52
  %v58 = vunpack.c.l.b16 %v53
  %v59 = vunpack.c.h.b16 %v53
  %v60 = vpack.c.b16 %v56, %v56
  %v61 = vpack.c.b16 %v57, %v57
  %v62 = vpack.c.b16 %v58, %v58
  %v63 = vpack.c.b16 %v59, %v59
  %vm68 = vcmask 257024
  %69 = vst.msk [vmem:[%s3] sm:$0xf] %vm68, %v60
  %70 = vst.msk [vmem:[%s3 + $0x4] sm:$0xf] %vm68, %v61
  %71 = vst.msk [vmem:[%s3 + $0x8] sm:$0xf] %vm68, %v62
  %72 = vst.msk [vmem:[%s3 + $0xc] sm:$0xf] %vm68, %v63
  // Predicated region
  $region14: #{discriminator_forward.10} parent=0 // pred_check
    _
  $region15: #{discriminator_forward.10} parent=0 // pred_check_branch
    %74 = sbr.rel (0) target = $region17
  $region16: #{discriminator_forward.10} parent=0 // pred_region
    _
  $region17: #{discriminator_forward.10} parent=0 // pred_fallthru
    _
  // Predicated region
  $region18: #{discriminator_forward.10} parent=0 // pred_check
    _
  $region19: #{discriminator_forward.10} parent=0 // pred_check_branch
    %76 = sbr.rel (0) target = $region21
  $region20: #{discriminator_forward.10} parent=0 // pred_region
    _
  $region21: #{discriminator_forward.10} parent=0 // pred_fallthru
    _

// kernel: discriminator_forward.11
$region0: #{discriminator_forward.11}
  #allocation0 [shape = 'u32[]', space=smem, size = 0x4, offset = 0x4, fixed_abs, tag = 'smem constant byte address 0x4 - core index']
  #allocation1 [shape = 'u32[144,128]{1,0:T(1,128)}', space=vmem, size = 0x12000, scoped, tag = 'internal scratch']
  %s0 = inlined_call_operand.vmem [shape: bf16[8,512], index: 0, kind: input, shape index: {}]
  %s1 = inlined_call_operand.vmem [shape: f32[1,512], index: 1, kind: input, shape index: {}]
  %s2 = inlined_call_operand.vmem [shape: f32[8,1], index: 2, kind: output, shape index: {}]
  %s3 = sld [smem:[#allocation0]]
  $region18: #{discriminator_forward.11} parent=0
    _
  %s5 = ssub.s32 1, %s3
  %s6 = scalar_select 0, %s5, %s3
  // Predicated region
  $region2: #{discriminator_forward.11} parent=0 // pred_check
    _
  $region3: #{discriminator_forward.11} parent=0 // pred_check_branch
    %8 = sbr.rel (0) target = $region5
  $region4: #{discriminator_forward.11} parent=0 // pred_region
    _
  $region5: #{discriminator_forward.11} parent=0 // pred_fallthru
    _
  // Predicated region
  $region6: #{discriminator_forward.11} parent=0 // pred_check
    _
  $region7: #{discriminator_forward.11} parent=0 // pred_check_branch
    %10 = sbr.rel (0) target = $region9
  $region8: #{discriminator_forward.11} parent=0 // pred_region
    _
  $region9: #{discriminator_forward.11} parent=0 // pred_fallthru
    _
  %v11 = vld [vmem:[%s0] sm:$0xff]
  %v12 = vld [vmem:[%s0 + $0x8] sm:$0xff]
  %v13 = vunpack.c.l.bf16 %v11
  %v14 = vunpack.c.h.bf16 %v11
  %v15 = vunpack.c.l.bf16 %v12
  %v16 = vunpack.c.h.bf16 %v12
  %v17 = vld [vmem:[%s1] sm:$0xf]
  %v19 = vlaneseq
  %v20 = vshrl.u32 %v19, 7
  %v21 = vsub.s32 0, %v20
  %v22 = vrot.slane %v17, %v21
  %v23 = vlaneseq
  %v24 = vshrl.u32 %v23, 7
  %v25 = vsub.s32 1, %v24
  %v26 = vrot.slane %v17, %v25
  %v27 = vlaneseq
  %v28 = vshrl.u32 %v27, 7
  %v29 = vsub.s32 2, %v28
  %v30 = vrot.slane %v17, %v29
  %v31 = vlaneseq
  %v32 = vshrl.u32 %v31, 7
  %v33 = vsub.s32 3, %v32
  %v34 = vrot.slane %v17, %v33
  %v39 = vmul.f32 %v13, %v22
  %v40 = vmul.f32 %v14, %v26
  %v41 = vmul.f32 %v15, %v30
  %v42 = vmul.f32 %v16, %v34
  %v43 = vadd.f32 %v39, %v40
  %v44 = vadd.f32 %v43, %v41
  %v45 = vadd.f32 %v44, %v42
  %46 = vadd.xlane.f32.xlu0 %v45
  %v47 = vpop.xlane.xlu0 %46
  %v48 = vxor.u32 %v47, 2147483648
  %v49 = vmul.f32 %v48, 1.442695
  %v50 = vpow.pop %v49
  %v51 = vadd.f32 %v50, 1.0
  %v52 = vrcp.pop %v51
  %v53 = vmul.f32 1.0, %v52
  %vm54 = vcmask 7168
  %55 = vst.msk [vmem:[%s2] sm:$0xff] %vm54, %v53
  // Predicated region
  $region10: #{discriminator_forward.11} parent=0 // pred_check
    _
  $region11: #{discriminator_forward.11} parent=0 // pred_check_branch
    %57 = sbr.rel (0) target = $region13
  $region12: #{discriminator_forward.11} parent=0 // pred_region
    _
  $region13: #{discriminator_forward.11} parent=0 // pred_fallthru
    _
  // Predicated region
  $region14: #{discriminator_forward.11} parent=0 // pred_check
    _
  $region15: #{discriminator_forward.11} parent=0 // pred_check_branch
    %59 = sbr.rel (0) target = $region17
  $region16: #{discriminator_forward.11} parent=0 // pred_region
    _
  $region17: #{discriminator_forward.11} parent=0 // pred_fallthru
    _

</llo_original>
